<compile_context>
chip_gen: v7x
topology: tpu7x:2x2x1
jax: 0.10.0
libtpu: 0.0.40
codegen_flags: <defaults>
</compile_context>

<pallas_src>
import math

import jax
import jax.numpy as jnp
from jax import lax
from jax.experimental import pallas as pl
from jax.experimental.pallas import tpu as pltpu

_LANE = 128   # lane width of a vreg
_SUB = 8      # f32 sublane tile


def _round_up(n, m):
    return ((n + m - 1) // m) * m


def lstm_attn_kernel(xw_ref,    # (T, Bt, 4*HP) precomputed x @ W_ih + bias (time-major)
                     whh_ref,   # (HP, 4*HP)    recurrent weights, gate-padded
                     attw_ref,  # (1, HP)       attention Linear weight
                     attb_ref,  # (1, 1)        attention Linear bias (SMEM)
                     fcw_ref,   # (HP, NCP)     final Linear weight (padded)
                     fcb_ref,   # (1, NCP)      final Linear bias (padded)
                     out_ref):  # (Bt, NCP)
    T, Bt, _ = xw_ref.shape
    HP = whh_ref.shape[0]

    # ---- loop invariants hoisted out of the recurrence ----------------------
    whh = whh_ref[...]          # (HP, 4*HP)
    attw = attw_ref[...]        # (1, HP)
    attb = attb_ref[0, 0]       # scalar (SMEM)

    h0 = jnp.zeros((Bt, HP), jnp.float32)
    c0 = jnp.zeros((Bt, HP), jnp.float32)
    m0 = jnp.full((Bt, 1), -jnp.inf, jnp.float32)
    l0 = jnp.zeros((Bt, 1), jnp.float32)
    a0 = jnp.zeros((Bt, HP), jnp.float32)

    def step(t, carry):
        h, c, m, l, acc = carry
        # Recurrent half of the gates only; input half was precomputed in the
        # wrapper as one big GEMM and arrives lane-dense via the xw input.
        gates = xw_ref[t] + jnp.dot(h, whh, preferred_element_type=jnp.float32)
        # Each gate occupies a full 128-lane-aligned block (zero padded), so
        # these slices are plain vreg selects -- no lane relayouts.
        i_g = jax.nn.sigmoid(gates[:, 0 * HP:1 * HP])
        f_g = jax.nn.sigmoid(gates[:, 1 * HP:2 * HP])
        g_g = jnp.tanh(gates[:, 2 * HP:3 * HP])
        o_g = jax.nn.sigmoid(gates[:, 3 * HP:4 * HP])
        c_new = f_g * c + i_g * g_g
        h_new = o_g * jnp.tanh(c_new)

        # Fused attention: online softmax over the time dimension.
        s = jnp.sum(h_new * attw, axis=-1, keepdims=True) + attb   # (Bt, 1)
        m_new = jnp.maximum(m, s)
        alpha = jnp.exp(m - m_new)
        p = jnp.exp(s - m_new)
        l_new = alpha * l + p
        acc_new = alpha * acc + p * h_new
        return (h_new, c_new, m_new, l_new, acc_new)

    # Full unroll at small T; capped unroll keeps the instruction footprint
    # bounded for long sequences.
    _, _, _, l, acc = lax.fori_loop(0, T, step, (h0, c0, m0, l0, a0),
                                    unroll=min(T, 8))

    # Softmax normalization: EUP approximate reciprocal + one Newton step
    # (restores full f32 accuracy, keeps the divide off the VALU).
    inv_l = pl.reciprocal(l, approx=True)
    inv_l = inv_l * (2.0 - l * inv_l)
    context = acc * inv_l                                           # (Bt, HP)

    out_ref[...] = (jnp.dot(context, fcw_ref[...],
                            preferred_element_type=jnp.float32)
                    + fcb_ref[...])


def lstm_node_classifier_with_attention(x, params):
    """x: (B, T, C) float32. Returns (B, n_classes) float32."""
    B, T, C = x.shape
    w_ih, w_hh, b_ih, b_hh, att_w, att_b, fc_w, fc_b = params
    H = w_hh.shape[1]
    NC = fc_w.shape[0]
    f32 = jnp.float32

    HP = _round_up(H, _LANE)          # hidden padded to 128 lanes
    NCP = _round_up(NC, _LANE)        # classes padded to 128 lanes
    # Batch tile: up to 128 rows so the per-step h @ W_hh matmul fills the MXU.
    # (Bump to 256 on v6e/v7x for very large batches if desired; 128 keeps
    # >=2 grid steps -- i.e. megacore shardable on v7x -- once B >= 256.)
    B_TILE = min(_LANE, _round_up(B, _SUB))
    B_pad = _round_up(B, B_TILE)
    nb = B_pad // B_TILE

    def pad_gate_cols(w):
        # (rows, 4H) -> (rows, 4*HP); gate k occupies columns [k*HP, k*HP + H),
        # padding is exact zeros so padded lanes of h/c stay identically zero.
        rows = w.shape[0]
        w4 = w.reshape(rows, 4, H).astype(f32)
        out = jnp.zeros((rows, 4, HP), f32).at[:, :, :H].set(w4)
        return out.reshape(rows, 4 * HP)

    wih_t = pad_gate_cols(jnp.transpose(w_ih))                       # (C, 4HP)
    whh_t = jnp.zeros((HP, 4 * HP), f32).at[:H, :].set(
        pad_gate_cols(jnp.transpose(w_hh)))                          # (HP, 4HP)
    bias = pad_gate_cols((b_ih + b_hh).reshape(1, 4 * H))            # (1, 4HP)
    attw = jnp.zeros((1, HP), f32).at[:, :H].set(
        att_w.reshape(1, H).astype(f32))                             # (1, HP)
    attb = att_b.reshape(1, 1).astype(f32)                           # (1, 1)
    fcw_t = jnp.zeros((HP, NCP), f32).at[:H, :NC].set(
        jnp.transpose(fc_w).astype(f32))                             # (HP, NCP)
    fcb = jnp.zeros((1, NCP), f32).at[:, :NC].set(
        fc_b.reshape(1, NC).astype(f32))                             # (1, NCP)

    # Input projection for ALL timesteps as one XLA GEMM in the wrapper:
    # xw[t, b, :] = x[b, t, :] @ W_ih^T + (b_ih + b_hh), gate-padded, lane
    # dense (last dim 4*HP), time-major so xw_ref[t] is a plain leading-dim
    # slice inside the kernel.  Padded batch rows are exact zeros.
    x_tm = jnp.transpose(x, (1, 0, 2)).astype(f32)                   # (T, B, C)
    xw = (x_tm.reshape(T * B, C) @ wih_t + bias).reshape(T, B, 4 * HP)
    xw_pad = jnp.zeros((T, B_pad, 4 * HP), f32).at[:, :B, :].set(xw)

    out = pl.pallas_call(
        lstm_attn_kernel,
        out_shape=jax.ShapeDtypeStruct((B_pad, NCP), f32),
        grid_spec=pltpu.PrefetchScalarGridSpec(
            num_scalar_prefetch=0,
            grid=(nb,),
            in_specs=[
                pl.BlockSpec((T, B_TILE, 4 * HP), lambda b: (0, b, 0)),  # xw
                pl.BlockSpec((HP, 4 * HP), lambda b: (0, 0)),            # W_hh
                pl.BlockSpec((1, HP), lambda b: (0, 0)),                 # att w
                pl.BlockSpec(memory_space=pltpu.MemorySpace.SMEM),       # att b
                pl.BlockSpec((HP, NCP), lambda b: (0, 0)),               # fc w
                pl.BlockSpec((1, NCP), lambda b: (0, 0)),                # fc b
            ],
            out_specs=pl.BlockSpec((B_TILE, NCP), lambda b: (b, 0)),
        ),
        compiler_params=pltpu.CompilerParams(
            dimension_semantics=("parallel",)),
    )(xw_pad, whh_t, attw, attb, fcw_t, fcb)

    return out[:B, :NC]


def _reference(x, params):
    """Pure-JAX reference mirroring the PyTorch forward."""
    w_ih, w_hh, b_ih, b_hh, att_w, att_b, fc_w, fc_b = params
    B, T, C = x.shape
    H = w_hh.shape[1]

    def cell(carry, x_t):
        h, c = carry
        gates = x_t @ w_ih.T + b_ih + h @ w_hh.T + b_hh
        i = jax.nn.sigmoid(gates[:, 0 * H:1 * H])
        f = jax.nn.sigmoid(gates[:, 1 * H:2 * H])
        g = jnp.tanh(gates[:, 2 * H:3 * H])
        o = jax.nn.sigmoid(gates[:, 3 * H:4 * H])
        c = f * c + i * g
        h = o * jnp.tanh(c)
        return (h, c), h

    h0 = jnp.zeros((B, H), jnp.float32)
    c0 = jnp.zeros((B, H), jnp.float32)
    _, hs = lax.scan(cell, (h0, c0), jnp.transpose(x, (1, 0, 2)))  # (T, B, H)
    hs = jnp.transpose(hs, (1, 0, 2))                              # (B, T, H)
    scores = hs @ att_w.T + att_b                                  # (B, T, 1)
    w = jax.nn.softmax(scores, axis=1)
    ctx = jnp.sum(hs * w, axis=1)                                  # (B, H)
    return ctx @ fc_w.T + fc_b


if __name__ == "__main__":
    B, T = 2, 8          # batch, sequence length
    C_IN = 4             # in_channels
    H = 32               # hidden_size
    NC = 5               # n_classes

    key = jax.random.PRNGKey(0)
    keys = jax.random.split(key, 9)
    k = 1.0 / math.sqrt(H)

    # Deterministic synthetic parameters (shapes follow nn.LSTM / nn.Linear).
    w_ih = jax.random.uniform(keys[0], (4 * H, C_IN), jnp.float32, -k, k)
    w_hh = jax.random.uniform(keys[1], (4 * H, H), jnp.float32, -k, k)
    b_ih = jax.random.uniform(keys[2], (4 * H,), jnp.float32, -k, k)
    b_hh = jax.random.uniform(keys[3], (4 * H,), jnp.float32, -k, k)
    att_w = jax.random.uniform(keys[4], (1, H), jnp.float32, -k, k)
    att_b = jax.random.uniform(keys[5], (1,), jnp.float32, -k, k)
    fc_w = jax.random.uniform(keys[6], (NC, H), jnp.float32, -k, k)
    fc_b = jax.random.uniform(keys[7], (NC,), jnp.float32, -k, k)
    params = (w_ih, w_hh, b_ih, b_hh, att_w, att_b, fc_w, fc_b)

    x = jax.random.normal(keys[8], (B, T, C_IN), jnp.float32)

    out = lstm_node_classifier_with_attention(x, params)
    out = jax.block_until_ready(out)

    ref = jax.block_until_ready(_reference(x, params))
    assert out.shape == (B, NC)
    assert jnp.allclose(out, ref, atol=1e-4, rtol=1e-4), (out, ref)

    print("KERNEL_OK")
</pallas_src>

<mosaic_0001>
module attributes {stable_mosaic.version = 11 : i64} {
  func.func @lstm_attn_kernel(%arg0: i32, %arg1: memref<8x8x512xf32, #tpu.memory_space<vmem>>, %arg2: memref<128x512xf32, #tpu.memory_space<vmem>>, %arg3: memref<1x128xf32, #tpu.memory_space<vmem>>, %arg4: memref<1x1xf32, #tpu.memory_space<smem>>, %arg5: memref<128x128xf32, #tpu.memory_space<vmem>>, %arg6: memref<1x128xf32, #tpu.memory_space<vmem>>, %arg7: memref<8x128xf32, #tpu.memory_space<vmem>>) attributes {dimension_semantics = [#tpu.dimension_semantics<parallel>], iteration_bounds = array<i64: 1>, scalar_prefetch = 0 : i64, scratch_operands = 0 : i64, tpu.core_type = #tpu.core_type<tc>, window_params = [{transform_indices = @transform_0, window_bounds = array<i64: 8, 8, 512>}, {pipeline_mode = #tpu.pipeline_mode<synchronous>, transform_indices = @transform_1, window_bounds = array<i64: 128, 512>}, {pipeline_mode = #tpu.pipeline_mode<synchronous>, transform_indices = @transform_2, window_bounds = array<i64: 1, 128>}, {transform_indices = @transform_3, window_bounds = array<i64: 1, 1>}, {pipeline_mode = #tpu.pipeline_mode<synchronous>, transform_indices = @transform_4, window_bounds = array<i64: 128, 128>}, {pipeline_mode = #tpu.pipeline_mode<synchronous>, transform_indices = @transform_5, window_bounds = array<i64: 1, 128>}, {transform_indices = @transform_6, window_bounds = array<i64: 8, 128>}]} {
    %c0 = arith.constant 0 : index
    %c0_0 = arith.constant 0 : index
    %0 = vector.load %arg2[%c0, %c0_0] : memref<128x512xf32, #tpu.memory_space<vmem>>, vector<128x512xf32>
    %c0_1 = arith.constant 0 : index
    %c0_2 = arith.constant 0 : index
    %1 = vector.load %arg3[%c0_1, %c0_2] : memref<1x128xf32, #tpu.memory_space<vmem>>, vector<1x128xf32>
    %c0_3 = arith.constant 0 : index
    %c0_4 = arith.constant 0 : index
    %2 = memref.load %arg4[%c0_3, %c0_4] : memref<1x1xf32, #tpu.memory_space<smem>>
    %cst = arith.constant 0.000000e+00 : f32
    %3 = vector.broadcast %cst : f32 to vector<8x128xf32>
    %cst_5 = arith.constant 0.000000e+00 : f32
    %4 = vector.broadcast %cst_5 : f32 to vector<8x128xf32>
    %cst_6 = arith.constant 0xFF800000 : f32
    %5 = vector.broadcast %cst_6 : f32 to vector<8x1xf32>
    %cst_7 = arith.constant 0.000000e+00 : f32
    %6 = vector.broadcast %cst_7 : f32 to vector<8x1xf32>
    %cst_8 = arith.constant 0.000000e+00 : f32
    %7 = vector.broadcast %cst_8 : f32 to vector<8x128xf32>
    %c0_i32 = arith.constant 0 : i32
    %8 = arith.index_cast %c0_i32 : i32 to index
    %c0_9 = arith.constant 0 : index
    %c0_10 = arith.constant 0 : index
    %9 = vector.load %arg1[%8, %c0_9, %c0_10] : memref<8x8x512xf32, #tpu.memory_space<vmem>>, vector<1x8x512xf32>
    %10 = vector.shape_cast %9 : vector<1x8x512xf32> to vector<8x512xf32>
    %cst_11 = arith.constant dense<0.000000e+00> : vector<8x512xf32>
    %11 = tpu.matmul %3, %0, %cst_11 {dimension_numbers = #tpu.dot_dimension_numbers<[1], [0], [0], [1], [0, 0, 1, 1], [], []>} : vector<8x128xf32>, vector<128x512xf32>, vector<8x512xf32> -> vector<8x512xf32>
    %12 = arith.addf %10, %11 : vector<8x512xf32>
    %13 = vector.extract_strided_slice %12 {offsets = [0, 0], sizes = [8, 128], strides = [1, 1]} : vector<8x512xf32> to vector<8x128xf32>
    %14 = arith.negf %13 : vector<8x128xf32>
    %15 = math.exp %14 : vector<8x128xf32>
    %cst_12 = arith.constant 1.000000e+00 : f32
    %16 = vector.broadcast %cst_12 : f32 to vector<8x128xf32>
    %17 = arith.addf %16, %15 : vector<8x128xf32>
    %18 = arith.divf %16, %17 : vector<8x128xf32>
    %19 = vector.extract_strided_slice %12 {offsets = [0, 128], sizes = [8, 128], strides = [1, 1]} : vector<8x512xf32> to vector<8x128xf32>
    %20 = arith.negf %19 : vector<8x128xf32>
    %21 = math.exp %20 : vector<8x128xf32>
    %cst_13 = arith.constant 1.000000e+00 : f32
    %22 = vector.broadcast %cst_13 : f32 to vector<8x128xf32>
    %23 = arith.addf %22, %21 : vector<8x128xf32>
    %24 = arith.divf %22, %23 : vector<8x128xf32>
    %25 = vector.extract_strided_slice %12 {offsets = [0, 256], sizes = [8, 128], strides = [1, 1]} : vector<8x512xf32> to vector<8x128xf32>
    %26 = math.tanh %25 : vector<8x128xf32>
    %27 = vector.extract_strided_slice %12 {offsets = [0, 384], sizes = [8, 128], strides = [1, 1]} : vector<8x512xf32> to vector<8x128xf32>
    %28 = arith.negf %27 : vector<8x128xf32>
    %29 = math.exp %28 : vector<8x128xf32>
    %cst_14 = arith.constant 1.000000e+00 : f32
    %30 = vector.broadcast %cst_14 : f32 to vector<8x128xf32>
    %31 = arith.addf %30, %29 : vector<8x128xf32>
    %32 = arith.divf %30, %31 : vector<8x128xf32>
    %33 = arith.mulf %24, %4 : vector<8x128xf32>
    %34 = arith.mulf %18, %26 : vector<8x128xf32>
    %35 = arith.addf %33, %34 : vector<8x128xf32>
    %36 = math.tanh %35 : vector<8x128xf32>
    %37 = arith.mulf %32, %36 : vector<8x128xf32>
    %38 = vector.broadcast %1 : vector<1x128xf32> to vector<8x128xf32>
    %39 = arith.mulf %37, %38 : vector<8x128xf32>
    %cst_15 = arith.constant dense<0.000000e+00> : vector<8xf32>
    %40 = vector.multi_reduction <add>, %39, %cst_15 [1] : vector<8x128xf32> to vector<8xf32>
    %41 = vector.shape_cast %40 : vector<8xf32> to vector<8x1xf32>
    %42 = vector.broadcast %2 : f32 to vector<8x1xf32>
    %43 = arith.addf %41, %42 : vector<8x1xf32>
    %44 = arith.maximumf %5, %43 : vector<8x1xf32>
    %45 = arith.subf %5, %44 : vector<8x1xf32>
    %46 = math.exp %45 : vector<8x1xf32>
    %47 = arith.subf %43, %44 : vector<8x1xf32>
    %48 = math.exp %47 : vector<8x1xf32>
    %49 = arith.mulf %46, %6 : vector<8x1xf32>
    %50 = arith.addf %49, %48 : vector<8x1xf32>
    %51 = vector.broadcast %46 : vector<8x1xf32> to vector<8x128xf32>
    %52 = arith.mulf %51, %7 : vector<8x128xf32>
    %53 = vector.broadcast %48 : vector<8x1xf32> to vector<8x128xf32>
    %54 = arith.mulf %53, %37 : vector<8x128xf32>
    %55 = arith.addf %52, %54 : vector<8x128xf32>
    %c1_i32 = arith.constant 1 : i32
    %56 = arith.index_cast %c1_i32 : i32 to index
    %c0_16 = arith.constant 0 : index
    %c0_17 = arith.constant 0 : index
    %57 = vector.load %arg1[%56, %c0_16, %c0_17] : memref<8x8x512xf32, #tpu.memory_space<vmem>>, vector<1x8x512xf32>
    %58 = vector.shape_cast %57 : vector<1x8x512xf32> to vector<8x512xf32>
    %cst_18 = arith.constant dense<0.000000e+00> : vector<8x512xf32>
    %59 = tpu.matmul %37, %0, %cst_18 {dimension_numbers = #tpu.dot_dimension_numbers<[1], [0], [0], [1], [0, 0, 1, 1], [], []>} : vector<8x128xf32>, vector<128x512xf32>, vector<8x512xf32> -> vector<8x512xf32>
    %60 = arith.addf %58, %59 : vector<8x512xf32>
    %61 = vector.extract_strided_slice %60 {offsets = [0, 0], sizes = [8, 128], strides = [1, 1]} : vector<8x512xf32> to vector<8x128xf32>
    %62 = arith.negf %61 : vector<8x128xf32>
    %63 = math.exp %62 : vector<8x128xf32>
    %cst_19 = arith.constant 1.000000e+00 : f32
    %64 = vector.broadcast %cst_19 : f32 to vector<8x128xf32>
    %65 = arith.addf %64, %63 : vector<8x128xf32>
    %66 = arith.divf %64, %65 : vector<8x128xf32>
    %67 = vector.extract_strided_slice %60 {offsets = [0, 128], sizes = [8, 128], strides = [1, 1]} : vector<8x512xf32> to vector<8x128xf32>
    %68 = arith.negf %67 : vector<8x128xf32>
    %69 = math.exp %68 : vector<8x128xf32>
    %cst_20 = arith.constant 1.000000e+00 : f32
    %70 = vector.broadcast %cst_20 : f32 to vector<8x128xf32>
    %71 = arith.addf %70, %69 : vector<8x128xf32>
    %72 = arith.divf %70, %71 : vector<8x128xf32>
    %73 = vector.extract_strided_slice %60 {offsets = [0, 256], sizes = [8, 128], strides = [1, 1]} : vector<8x512xf32> to vector<8x128xf32>
    %74 = math.tanh %73 : vector<8x128xf32>
    %75 = vector.extract_strided_slice %60 {offsets = [0, 384], sizes = [8, 128], strides = [1, 1]} : vector<8x512xf32> to vector<8x128xf32>
    %76 = arith.negf %75 : vector<8x128xf32>
    %77 = math.exp %76 : vector<8x128xf32>
    %cst_21 = arith.constant 1.000000e+00 : f32
    %78 = vector.broadcast %cst_21 : f32 to vector<8x128xf32>
    %79 = arith.addf %78, %77 : vector<8x128xf32>
    %80 = arith.divf %78, %79 : vector<8x128xf32>
    %81 = arith.mulf %72, %35 : vector<8x128xf32>
    %82 = arith.mulf %66, %74 : vector<8x128xf32>
    %83 = arith.addf %81, %82 : vector<8x128xf32>
    %84 = math.tanh %83 : vector<8x128xf32>
    %85 = arith.mulf %80, %84 : vector<8x128xf32>
    %86 = vector.broadcast %1 : vector<1x128xf32> to vector<8x128xf32>
    %87 = arith.mulf %85, %86 : vector<8x128xf32>
    %cst_22 = arith.constant dense<0.000000e+00> : vector<8xf32>
    %88 = vector.multi_reduction <add>, %87, %cst_22 [1] : vector<8x128xf32> to vector<8xf32>
    %89 = vector.shape_cast %88 : vector<8xf32> to vector<8x1xf32>
    %90 = vector.broadcast %2 : f32 to vector<8x1xf32>
    %91 = arith.addf %89, %90 : vector<8x1xf32>
    %92 = arith.maximumf %44, %91 : vector<8x1xf32>
    %93 = arith.subf %44, %92 : vector<8x1xf32>
    %94 = math.exp %93 : vector<8x1xf32>
    %95 = arith.subf %91, %92 : vector<8x1xf32>
    %96 = math.exp %95 : vector<8x1xf32>
    %97 = arith.mulf %94, %50 : vector<8x1xf32>
    %98 = arith.addf %97, %96 : vector<8x1xf32>
    %99 = vector.broadcast %94 : vector<8x1xf32> to vector<8x128xf32>
    %100 = arith.mulf %99, %55 : vector<8x128xf32>
    %101 = vector.broadcast %96 : vector<8x1xf32> to vector<8x128xf32>
    %102 = arith.mulf %101, %85 : vector<8x128xf32>
    %103 = arith.addf %100, %102 : vector<8x128xf32>
    %c2_i32 = arith.constant 2 : i32
    %104 = arith.index_cast %c2_i32 : i32 to index
    %c0_23 = arith.constant 0 : index
    %c0_24 = arith.constant 0 : index
    %105 = vector.load %arg1[%104, %c0_23, %c0_24] : memref<8x8x512xf32, #tpu.memory_space<vmem>>, vector<1x8x512xf32>
    %106 = vector.shape_cast %105 : vector<1x8x512xf32> to vector<8x512xf32>
    %cst_25 = arith.constant dense<0.000000e+00> : vector<8x512xf32>
    %107 = tpu.matmul %85, %0, %cst_25 {dimension_numbers = #tpu.dot_dimension_numbers<[1], [0], [0], [1], [0, 0, 1, 1], [], []>} : vector<8x128xf32>, vector<128x512xf32>, vector<8x512xf32> -> vector<8x512xf32>
    %108 = arith.addf %106, %107 : vector<8x512xf32>
    %109 = vector.extract_strided_slice %108 {offsets = [0, 0], sizes = [8, 128], strides = [1, 1]} : vector<8x512xf32> to vector<8x128xf32>
    %110 = arith.negf %109 : vector<8x128xf32>
    %111 = math.exp %110 : vector<8x128xf32>
    %cst_26 = arith.constant 1.000000e+00 : f32
    %112 = vector.broadcast %cst_26 : f32 to vector<8x128xf32>
    %113 = arith.addf %112, %111 : vector<8x128xf32>
    %114 = arith.divf %112, %113 : vector<8x128xf32>
    %115 = vector.extract_strided_slice %108 {offsets = [0, 128], sizes = [8, 128], strides = [1, 1]} : vector<8x512xf32> to vector<8x128xf32>
    %116 = arith.negf %115 : vector<8x128xf32>
    %117 = math.exp %116 : vector<8x128xf32>
    %cst_27 = arith.constant 1.000000e+00 : f32
    %118 = vector.broadcast %cst_27 : f32 to vector<8x128xf32>
    %119 = arith.addf %118, %117 : vector<8x128xf32>
    %120 = arith.divf %118, %119 : vector<8x128xf32>
    %121 = vector.extract_strided_slice %108 {offsets = [0, 256], sizes = [8, 128], strides = [1, 1]} : vector<8x512xf32> to vector<8x128xf32>
    %122 = math.tanh %121 : vector<8x128xf32>
    %123 = vector.extract_strided_slice %108 {offsets = [0, 384], sizes = [8, 128], strides = [1, 1]} : vector<8x512xf32> to vector<8x128xf32>
    %124 = arith.negf %123 : vector<8x128xf32>
    %125 = math.exp %124 : vector<8x128xf32>
    %cst_28 = arith.constant 1.000000e+00 : f32
    %126 = vector.broadcast %cst_28 : f32 to vector<8x128xf32>
    %127 = arith.addf %126, %125 : vector<8x128xf32>
    %128 = arith.divf %126, %127 : vector<8x128xf32>
    %129 = arith.mulf %120, %83 : vector<8x128xf32>
    %130 = arith.mulf %114, %122 : vector<8x128xf32>
    %131 = arith.addf %129, %130 : vector<8x128xf32>
    %132 = math.tanh %131 : vector<8x128xf32>
    %133 = arith.mulf %128, %132 : vector<8x128xf32>
    %134 = vector.broadcast %1 : vector<1x128xf32> to vector<8x128xf32>
    %135 = arith.mulf %133, %134 : vector<8x128xf32>
    %cst_29 = arith.constant dense<0.000000e+00> : vector<8xf32>
    %136 = vector.multi_reduction <add>, %135, %cst_29 [1] : vector<8x128xf32> to vector<8xf32>
    %137 = vector.shape_cast %136 : vector<8xf32> to vector<8x1xf32>
    %138 = vector.broadcast %2 : f32 to vector<8x1xf32>
    %139 = arith.addf %137, %138 : vector<8x1xf32>
    %140 = arith.maximumf %92, %139 : vector<8x1xf32>
    %141 = arith.subf %92, %140 : vector<8x1xf32>
    %142 = math.exp %141 : vector<8x1xf32>
    %143 = arith.subf %139, %140 : vector<8x1xf32>
    %144 = math.exp %143 : vector<8x1xf32>
    %145 = arith.mulf %142, %98 : vector<8x1xf32>
    %146 = arith.addf %145, %144 : vector<8x1xf32>
    %147 = vector.broadcast %142 : vector<8x1xf32> to vector<8x128xf32>
    %148 = arith.mulf %147, %103 : vector<8x128xf32>
    %149 = vector.broadcast %144 : vector<8x1xf32> to vector<8x128xf32>
    %150 = arith.mulf %149, %133 : vector<8x128xf32>
    %151 = arith.addf %148, %150 : vector<8x128xf32>
    %c3_i32 = arith.constant 3 : i32
    %152 = arith.index_cast %c3_i32 : i32 to index
    %c0_30 = arith.constant 0 : index
    %c0_31 = arith.constant 0 : index
    %153 = vector.load %arg1[%152, %c0_30, %c0_31] : memref<8x8x512xf32, #tpu.memory_space<vmem>>, vector<1x8x512xf32>
    %154 = vector.shape_cast %153 : vector<1x8x512xf32> to vector<8x512xf32>
    %cst_32 = arith.constant dense<0.000000e+00> : vector<8x512xf32>
    %155 = tpu.matmul %133, %0, %cst_32 {dimension_numbers = #tpu.dot_dimension_numbers<[1], [0], [0], [1], [0, 0, 1, 1], [], []>} : vector<8x128xf32>, vector<128x512xf32>, vector<8x512xf32> -> vector<8x512xf32>
    %156 = arith.addf %154, %155 : vector<8x512xf32>
    %157 = vector.extract_strided_slice %156 {offsets = [0, 0], sizes = [8, 128], strides = [1, 1]} : vector<8x512xf32> to vector<8x128xf32>
    %158 = arith.negf %157 : vector<8x128xf32>
    %159 = math.exp %158 : vector<8x128xf32>
    %cst_33 = arith.constant 1.000000e+00 : f32
    %160 = vector.broadcast %cst_33 : f32 to vector<8x128xf32>
    %161 = arith.addf %160, %159 : vector<8x128xf32>
    %162 = arith.divf %160, %161 : vector<8x128xf32>
    %163 = vector.extract_strided_slice %156 {offsets = [0, 128], sizes = [8, 128], strides = [1, 1]} : vector<8x512xf32> to vector<8x128xf32>
    %164 = arith.negf %163 : vector<8x128xf32>
    %165 = math.exp %164 : vector<8x128xf32>
    %cst_34 = arith.constant 1.000000e+00 : f32
    %166 = vector.broadcast %cst_34 : f32 to vector<8x128xf32>
    %167 = arith.addf %166, %165 : vector<8x128xf32>
    %168 = arith.divf %166, %167 : vector<8x128xf32>
    %169 = vector.extract_strided_slice %156 {offsets = [0, 256], sizes = [8, 128], strides = [1, 1]} : vector<8x512xf32> to vector<8x128xf32>
    %170 = math.tanh %169 : vector<8x128xf32>
    %171 = vector.extract_strided_slice %156 {offsets = [0, 384], sizes = [8, 128], strides = [1, 1]} : vector<8x512xf32> to vector<8x128xf32>
    %172 = arith.negf %171 : vector<8x128xf32>
    %173 = math.exp %172 : vector<8x128xf32>
    %cst_35 = arith.constant 1.000000e+00 : f32
    %174 = vector.broadcast %cst_35 : f32 to vector<8x128xf32>
    %175 = arith.addf %174, %173 : vector<8x128xf32>
    %176 = arith.divf %174, %175 : vector<8x128xf32>
    %177 = arith.mulf %168, %131 : vector<8x128xf32>
    %178 = arith.mulf %162, %170 : vector<8x128xf32>
    %179 = arith.addf %177, %178 : vector<8x128xf32>
    %180 = math.tanh %179 : vector<8x128xf32>
    %181 = arith.mulf %176, %180 : vector<8x128xf32>
    %182 = vector.broadcast %1 : vector<1x128xf32> to vector<8x128xf32>
    %183 = arith.mulf %181, %182 : vector<8x128xf32>
    %cst_36 = arith.constant dense<0.000000e+00> : vector<8xf32>
    %184 = vector.multi_reduction <add>, %183, %cst_36 [1] : vector<8x128xf32> to vector<8xf32>
    %185 = vector.shape_cast %184 : vector<8xf32> to vector<8x1xf32>
    %186 = vector.broadcast %2 : f32 to vector<8x1xf32>
    %187 = arith.addf %185, %186 : vector<8x1xf32>
    %188 = arith.maximumf %140, %187 : vector<8x1xf32>
    %189 = arith.subf %140, %188 : vector<8x1xf32>
    %190 = math.exp %189 : vector<8x1xf32>
    %191 = arith.subf %187, %188 : vector<8x1xf32>
    %192 = math.exp %191 : vector<8x1xf32>
    %193 = arith.mulf %190, %146 : vector<8x1xf32>
    %194 = arith.addf %193, %192 : vector<8x1xf32>
    %195 = vector.broadcast %190 : vector<8x1xf32> to vector<8x128xf32>
    %196 = arith.mulf %195, %151 : vector<8x128xf32>
    %197 = vector.broadcast %192 : vector<8x1xf32> to vector<8x128xf32>
    %198 = arith.mulf %197, %181 : vector<8x128xf32>
    %199 = arith.addf %196, %198 : vector<8x128xf32>
    %c4_i32 = arith.constant 4 : i32
    %200 = arith.index_cast %c4_i32 : i32 to index
    %c0_37 = arith.constant 0 : index
    %c0_38 = arith.constant 0 : index
    %201 = vector.load %arg1[%200, %c0_37, %c0_38] : memref<8x8x512xf32, #tpu.memory_space<vmem>>, vector<1x8x512xf32>
    %202 = vector.shape_cast %201 : vector<1x8x512xf32> to vector<8x512xf32>
    %cst_39 = arith.constant dense<0.000000e+00> : vector<8x512xf32>
    %203 = tpu.matmul %181, %0, %cst_39 {dimension_numbers = #tpu.dot_dimension_numbers<[1], [0], [0], [1], [0, 0, 1, 1], [], []>} : vector<8x128xf32>, vector<128x512xf32>, vector<8x512xf32> -> vector<8x512xf32>
    %204 = arith.addf %202, %203 : vector<8x512xf32>
    %205 = vector.extract_strided_slice %204 {offsets = [0, 0], sizes = [8, 128], strides = [1, 1]} : vector<8x512xf32> to vector<8x128xf32>
    %206 = arith.negf %205 : vector<8x128xf32>
    %207 = math.exp %206 : vector<8x128xf32>
    %cst_40 = arith.constant 1.000000e+00 : f32
    %208 = vector.broadcast %cst_40 : f32 to vector<8x128xf32>
    %209 = arith.addf %208, %207 : vector<8x128xf32>
    %210 = arith.divf %208, %209 : vector<8x128xf32>
    %211 = vector.extract_strided_slice %204 {offsets = [0, 128], sizes = [8, 128], strides = [1, 1]} : vector<8x512xf32> to vector<8x128xf32>
    %212 = arith.negf %211 : vector<8x128xf32>
    %213 = math.exp %212 : vector<8x128xf32>
    %cst_41 = arith.constant 1.000000e+00 : f32
    %214 = vector.broadcast %cst_41 : f32 to vector<8x128xf32>
    %215 = arith.addf %214, %213 : vector<8x128xf32>
    %216 = arith.divf %214, %215 : vector<8x128xf32>
    %217 = vector.extract_strided_slice %204 {offsets = [0, 256], sizes = [8, 128], strides = [1, 1]} : vector<8x512xf32> to vector<8x128xf32>
    %218 = math.tanh %217 : vector<8x128xf32>
    %219 = vector.extract_strided_slice %204 {offsets = [0, 384], sizes = [8, 128], strides = [1, 1]} : vector<8x512xf32> to vector<8x128xf32>
    %220 = arith.negf %219 : vector<8x128xf32>
    %221 = math.exp %220 : vector<8x128xf32>
    %cst_42 = arith.constant 1.000000e+00 : f32
    %222 = vector.broadcast %cst_42 : f32 to vector<8x128xf32>
    %223 = arith.addf %222, %221 : vector<8x128xf32>
    %224 = arith.divf %222, %223 : vector<8x128xf32>
    %225 = arith.mulf %216, %179 : vector<8x128xf32>
    %226 = arith.mulf %210, %218 : vector<8x128xf32>
    %227 = arith.addf %225, %226 : vector<8x128xf32>
    %228 = math.tanh %227 : vector<8x128xf32>
    %229 = arith.mulf %224, %228 : vector<8x128xf32>
    %230 = vector.broadcast %1 : vector<1x128xf32> to vector<8x128xf32>
    %231 = arith.mulf %229, %230 : vector<8x128xf32>
    %cst_43 = arith.constant dense<0.000000e+00> : vector<8xf32>
    %232 = vector.multi_reduction <add>, %231, %cst_43 [1] : vector<8x128xf32> to vector<8xf32>
    %233 = vector.shape_cast %232 : vector<8xf32> to vector<8x1xf32>
    %234 = vector.broadcast %2 : f32 to vector<8x1xf32>
    %235 = arith.addf %233, %234 : vector<8x1xf32>
    %236 = arith.maximumf %188, %235 : vector<8x1xf32>
    %237 = arith.subf %188, %236 : vector<8x1xf32>
    %238 = math.exp %237 : vector<8x1xf32>
    %239 = arith.subf %235, %236 : vector<8x1xf32>
    %240 = math.exp %239 : vector<8x1xf32>
    %241 = arith.mulf %238, %194 : vector<8x1xf32>
    %242 = arith.addf %241, %240 : vector<8x1xf32>
    %243 = vector.broadcast %238 : vector<8x1xf32> to vector<8x128xf32>
    %244 = arith.mulf %243, %199 : vector<8x128xf32>
    %245 = vector.broadcast %240 : vector<8x1xf32> to vector<8x128xf32>
    %246 = arith.mulf %245, %229 : vector<8x128xf32>
    %247 = arith.addf %244, %246 : vector<8x128xf32>
    %c5_i32 = arith.constant 5 : i32
    %248 = arith.index_cast %c5_i32 : i32 to index
    %c0_44 = arith.constant 0 : index
    %c0_45 = arith.constant 0 : index
    %249 = vector.load %arg1[%248, %c0_44, %c0_45] : memref<8x8x512xf32, #tpu.memory_space<vmem>>, vector<1x8x512xf32>
    %250 = vector.shape_cast %249 : vector<1x8x512xf32> to vector<8x512xf32>
    %cst_46 = arith.constant dense<0.000000e+00> : vector<8x512xf32>
    %251 = tpu.matmul %229, %0, %cst_46 {dimension_numbers = #tpu.dot_dimension_numbers<[1], [0], [0], [1], [0, 0, 1, 1], [], []>} : vector<8x128xf32>, vector<128x512xf32>, vector<8x512xf32> -> vector<8x512xf32>
    %252 = arith.addf %250, %251 : vector<8x512xf32>
    %253 = vector.extract_strided_slice %252 {offsets = [0, 0], sizes = [8, 128], strides = [1, 1]} : vector<8x512xf32> to vector<8x128xf32>
    %254 = arith.negf %253 : vector<8x128xf32>
    %255 = math.exp %254 : vector<8x128xf32>
    %cst_47 = arith.constant 1.000000e+00 : f32
    %256 = vector.broadcast %cst_47 : f32 to vector<8x128xf32>
    %257 = arith.addf %256, %255 : vector<8x128xf32>
    %258 = arith.divf %256, %257 : vector<8x128xf32>
    %259 = vector.extract_strided_slice %252 {offsets = [0, 128], sizes = [8, 128], strides = [1, 1]} : vector<8x512xf32> to vector<8x128xf32>
    %260 = arith.negf %259 : vector<8x128xf32>
    %261 = math.exp %260 : vector<8x128xf32>
    %cst_48 = arith.constant 1.000000e+00 : f32
    %262 = vector.broadcast %cst_48 : f32 to vector<8x128xf32>
    %263 = arith.addf %262, %261 : vector<8x128xf32>
    %264 = arith.divf %262, %263 : vector<8x128xf32>
    %265 = vector.extract_strided_slice %252 {offsets = [0, 256], sizes = [8, 128], strides = [1, 1]} : vector<8x512xf32> to vector<8x128xf32>
    %266 = math.tanh %265 : vector<8x128xf32>
    %267 = vector.extract_strided_slice %252 {offsets = [0, 384], sizes = [8, 128], strides = [1, 1]} : vector<8x512xf32> to vector<8x128xf32>
    %268 = arith.negf %267 : vector<8x128xf32>
    %269 = math.exp %268 : vector<8x128xf32>
    %cst_49 = arith.constant 1.000000e+00 : f32
    %270 = vector.broadcast %cst_49 : f32 to vector<8x128xf32>
    %271 = arith.addf %270, %269 : vector<8x128xf32>
    %272 = arith.divf %270, %271 : vector<8x128xf32>
    %273 = arith.mulf %264, %227 : vector<8x128xf32>
    %274 = arith.mulf %258, %266 : vector<8x128xf32>
    %275 = arith.addf %273, %274 : vector<8x128xf32>
    %276 = math.tanh %275 : vector<8x128xf32>
    %277 = arith.mulf %272, %276 : vector<8x128xf32>
    %278 = vector.broadcast %1 : vector<1x128xf32> to vector<8x128xf32>
    %279 = arith.mulf %277, %278 : vector<8x128xf32>
    %cst_50 = arith.constant dense<0.000000e+00> : vector<8xf32>
    %280 = vector.multi_reduction <add>, %279, %cst_50 [1] : vector<8x128xf32> to vector<8xf32>
    %281 = vector.shape_cast %280 : vector<8xf32> to vector<8x1xf32>
    %282 = vector.broadcast %2 : f32 to vector<8x1xf32>
    %283 = arith.addf %281, %282 : vector<8x1xf32>
    %284 = arith.maximumf %236, %283 : vector<8x1xf32>
    %285 = arith.subf %236, %284 : vector<8x1xf32>
    %286 = math.exp %285 : vector<8x1xf32>
    %287 = arith.subf %283, %284 : vector<8x1xf32>
    %288 = math.exp %287 : vector<8x1xf32>
    %289 = arith.mulf %286, %242 : vector<8x1xf32>
    %290 = arith.addf %289, %288 : vector<8x1xf32>
    %291 = vector.broadcast %286 : vector<8x1xf32> to vector<8x128xf32>
    %292 = arith.mulf %291, %247 : vector<8x128xf32>
    %293 = vector.broadcast %288 : vector<8x1xf32> to vector<8x128xf32>
    %294 = arith.mulf %293, %277 : vector<8x128xf32>
    %295 = arith.addf %292, %294 : vector<8x128xf32>
    %c6_i32 = arith.constant 6 : i32
    %296 = arith.index_cast %c6_i32 : i32 to index
    %c0_51 = arith.constant 0 : index
    %c0_52 = arith.constant 0 : index
    %297 = vector.load %arg1[%296, %c0_51, %c0_52] : memref<8x8x512xf32, #tpu.memory_space<vmem>>, vector<1x8x512xf32>
    %298 = vector.shape_cast %297 : vector<1x8x512xf32> to vector<8x512xf32>
    %cst_53 = arith.constant dense<0.000000e+00> : vector<8x512xf32>
    %299 = tpu.matmul %277, %0, %cst_53 {dimension_numbers = #tpu.dot_dimension_numbers<[1], [0], [0], [1], [0, 0, 1, 1], [], []>} : vector<8x128xf32>, vector<128x512xf32>, vector<8x512xf32> -> vector<8x512xf32>
    %300 = arith.addf %298, %299 : vector<8x512xf32>
    %301 = vector.extract_strided_slice %300 {offsets = [0, 0], sizes = [8, 128], strides = [1, 1]} : vector<8x512xf32> to vector<8x128xf32>
    %302 = arith.negf %301 : vector<8x128xf32>
    %303 = math.exp %302 : vector<8x128xf32>
    %cst_54 = arith.constant 1.000000e+00 : f32
    %304 = vector.broadcast %cst_54 : f32 to vector<8x128xf32>
    %305 = arith.addf %304, %303 : vector<8x128xf32>
    %306 = arith.divf %304, %305 : vector<8x128xf32>
    %307 = vector.extract_strided_slice %300 {offsets = [0, 128], sizes = [8, 128], strides = [1, 1]} : vector<8x512xf32> to vector<8x128xf32>
    %308 = arith.negf %307 : vector<8x128xf32>
    %309 = math.exp %308 : vector<8x128xf32>
    %cst_55 = arith.constant 1.000000e+00 : f32
    %310 = vector.broadcast %cst_55 : f32 to vector<8x128xf32>
    %311 = arith.addf %310, %309 : vector<8x128xf32>
    %312 = arith.divf %310, %311 : vector<8x128xf32>
    %313 = vector.extract_strided_slice %300 {offsets = [0, 256], sizes = [8, 128], strides = [1, 1]} : vector<8x512xf32> to vector<8x128xf32>
    %314 = math.tanh %313 : vector<8x128xf32>
    %315 = vector.extract_strided_slice %300 {offsets = [0, 384], sizes = [8, 128], strides = [1, 1]} : vector<8x512xf32> to vector<8x128xf32>
    %316 = arith.negf %315 : vector<8x128xf32>
    %317 = math.exp %316 : vector<8x128xf32>
    %cst_56 = arith.constant 1.000000e+00 : f32
    %318 = vector.broadcast %cst_56 : f32 to vector<8x128xf32>
    %319 = arith.addf %318, %317 : vector<8x128xf32>
    %320 = arith.divf %318, %319 : vector<8x128xf32>
    %321 = arith.mulf %312, %275 : vector<8x128xf32>
    %322 = arith.mulf %306, %314 : vector<8x128xf32>
    %323 = arith.addf %321, %322 : vector<8x128xf32>
    %324 = math.tanh %323 : vector<8x128xf32>
    %325 = arith.mulf %320, %324 : vector<8x128xf32>
    %326 = vector.broadcast %1 : vector<1x128xf32> to vector<8x128xf32>
    %327 = arith.mulf %325, %326 : vector<8x128xf32>
    %cst_57 = arith.constant dense<0.000000e+00> : vector<8xf32>
    %328 = vector.multi_reduction <add>, %327, %cst_57 [1] : vector<8x128xf32> to vector<8xf32>
    %329 = vector.shape_cast %328 : vector<8xf32> to vector<8x1xf32>
    %330 = vector.broadcast %2 : f32 to vector<8x1xf32>
    %331 = arith.addf %329, %330 : vector<8x1xf32>
    %332 = arith.maximumf %284, %331 : vector<8x1xf32>
    %333 = arith.subf %284, %332 : vector<8x1xf32>
    %334 = math.exp %333 : vector<8x1xf32>
    %335 = arith.subf %331, %332 : vector<8x1xf32>
    %336 = math.exp %335 : vector<8x1xf32>
    %337 = arith.mulf %334, %290 : vector<8x1xf32>
    %338 = arith.addf %337, %336 : vector<8x1xf32>
    %339 = vector.broadcast %334 : vector<8x1xf32> to vector<8x128xf32>
    %340 = arith.mulf %339, %295 : vector<8x128xf32>
    %341 = vector.broadcast %336 : vector<8x1xf32> to vector<8x128xf32>
    %342 = arith.mulf %341, %325 : vector<8x128xf32>
    %343 = arith.addf %340, %342 : vector<8x128xf32>
    %c7_i32 = arith.constant 7 : i32
    %344 = arith.index_cast %c7_i32 : i32 to index
    %c0_58 = arith.constant 0 : index
    %c0_59 = arith.constant 0 : index
    %345 = vector.load %arg1[%344, %c0_58, %c0_59] : memref<8x8x512xf32, #tpu.memory_space<vmem>>, vector<1x8x512xf32>
    %346 = vector.shape_cast %345 : vector<1x8x512xf32> to vector<8x512xf32>
    %cst_60 = arith.constant dense<0.000000e+00> : vector<8x512xf32>
    %347 = tpu.matmul %325, %0, %cst_60 {dimension_numbers = #tpu.dot_dimension_numbers<[1], [0], [0], [1], [0, 0, 1, 1], [], []>} : vector<8x128xf32>, vector<128x512xf32>, vector<8x512xf32> -> vector<8x512xf32>
    %348 = arith.addf %346, %347 : vector<8x512xf32>
    %349 = vector.extract_strided_slice %348 {offsets = [0, 0], sizes = [8, 128], strides = [1, 1]} : vector<8x512xf32> to vector<8x128xf32>
    %350 = arith.negf %349 : vector<8x128xf32>
    %351 = math.exp %350 : vector<8x128xf32>
    %cst_61 = arith.constant 1.000000e+00 : f32
    %352 = vector.broadcast %cst_61 : f32 to vector<8x128xf32>
    %353 = arith.addf %352, %351 : vector<8x128xf32>
    %354 = arith.divf %352, %353 : vector<8x128xf32>
    %355 = vector.extract_strided_slice %348 {offsets = [0, 128], sizes = [8, 128], strides = [1, 1]} : vector<8x512xf32> to vector<8x128xf32>
    %356 = arith.negf %355 : vector<8x128xf32>
    %357 = math.exp %356 : vector<8x128xf32>
    %cst_62 = arith.constant 1.000000e+00 : f32
    %358 = vector.broadcast %cst_62 : f32 to vector<8x128xf32>
    %359 = arith.addf %358, %357 : vector<8x128xf32>
    %360 = arith.divf %358, %359 : vector<8x128xf32>
    %361 = vector.extract_strided_slice %348 {offsets = [0, 256], sizes = [8, 128], strides = [1, 1]} : vector<8x512xf32> to vector<8x128xf32>
    %362 = math.tanh %361 : vector<8x128xf32>
    %363 = vector.extract_strided_slice %348 {offsets = [0, 384], sizes = [8, 128], strides = [1, 1]} : vector<8x512xf32> to vector<8x128xf32>
    %364 = arith.negf %363 : vector<8x128xf32>
    %365 = math.exp %364 : vector<8x128xf32>
    %cst_63 = arith.constant 1.000000e+00 : f32
    %366 = vector.broadcast %cst_63 : f32 to vector<8x128xf32>
    %367 = arith.addf %366, %365 : vector<8x128xf32>
    %368 = arith.divf %366, %367 : vector<8x128xf32>
    %369 = arith.mulf %360, %323 : vector<8x128xf32>
    %370 = arith.mulf %354, %362 : vector<8x128xf32>
    %371 = arith.addf %369, %370 : vector<8x128xf32>
    %372 = math.tanh %371 : vector<8x128xf32>
    %373 = arith.mulf %368, %372 : vector<8x128xf32>
    %374 = vector.broadcast %1 : vector<1x128xf32> to vector<8x128xf32>
    %375 = arith.mulf %373, %374 : vector<8x128xf32>
    %cst_64 = arith.constant dense<0.000000e+00> : vector<8xf32>
    %376 = vector.multi_reduction <add>, %375, %cst_64 [1] : vector<8x128xf32> to vector<8xf32>
    %377 = vector.shape_cast %376 : vector<8xf32> to vector<8x1xf32>
    %378 = vector.broadcast %2 : f32 to vector<8x1xf32>
    %379 = arith.addf %377, %378 : vector<8x1xf32>
    %380 = arith.maximumf %332, %379 : vector<8x1xf32>
    %381 = arith.subf %332, %380 : vector<8x1xf32>
    %382 = math.exp %381 : vector<8x1xf32>
    %383 = arith.subf %379, %380 : vector<8x1xf32>
    %384 = math.exp %383 : vector<8x1xf32>
    %385 = arith.mulf %382, %338 : vector<8x1xf32>
    %386 = arith.addf %385, %384 : vector<8x1xf32>
    %387 = vector.broadcast %382 : vector<8x1xf32> to vector<8x128xf32>
    %388 = arith.mulf %387, %343 : vector<8x128xf32>
    %389 = vector.broadcast %384 : vector<8x1xf32> to vector<8x128xf32>
    %390 = arith.mulf %389, %373 : vector<8x128xf32>
    %391 = arith.addf %388, %390 : vector<8x128xf32>
    %c8_i32 = arith.constant 8 : i32
    %392 = tpu.reciprocal %386 {approx = true} : vector<8x1xf32> -> vector<8x1xf32>
    %393 = arith.mulf %386, %392 : vector<8x1xf32>
    %cst_65 = arith.constant 2.000000e+00 : f32
    %394 = vector.broadcast %cst_65 : f32 to vector<8x1xf32>
    %395 = arith.subf %394, %393 : vector<8x1xf32>
    %396 = arith.mulf %392, %395 : vector<8x1xf32>
    %397 = vector.broadcast %396 : vector<8x1xf32> to vector<8x128xf32>
    %398 = arith.mulf %391, %397 : vector<8x128xf32>
    %c0_66 = arith.constant 0 : index
    %c0_67 = arith.constant 0 : index
    %399 = vector.load %arg5[%c0_66, %c0_67] : memref<128x128xf32, #tpu.memory_space<vmem>>, vector<128x128xf32>
    %cst_68 = arith.constant dense<0.000000e+00> : vector<8x128xf32>
    %400 = tpu.matmul %398, %399, %cst_68 {dimension_numbers = #tpu.dot_dimension_numbers<[1], [0], [0], [1], [0, 0, 1, 1], [], []>} : vector<8x128xf32>, vector<128x128xf32>, vector<8x128xf32> -> vector<8x128xf32>
    %c0_69 = arith.constant 0 : index
    %c0_70 = arith.constant 0 : index
    %401 = vector.load %arg6[%c0_69, %c0_70] : memref<1x128xf32, #tpu.memory_space<vmem>>, vector<1x128xf32>
    %402 = vector.broadcast %401 : vector<1x128xf32> to vector<8x128xf32>
    %403 = arith.addf %400, %402 : vector<8x128xf32>
    %c0_71 = arith.constant 0 : index
    %c0_72 = arith.constant 0 : index
    %404 = vector.load %arg7[%c0_71, %c0_72] : memref<8x128xf32, #tpu.memory_space<vmem>>, vector<8x128xf32>
    tpu.vector_store %arg7[%c0_71, %c0_72], %403 {strides = array<i32>} : memref<8x128xf32, #tpu.memory_space<vmem>>, vector<8x128xf32>,
    return
  }
  func.func @transform_0(%arg0: i32) -> (i32, i32, i32) {
    %c0_i32 = arith.constant 0 : i32
    %c0_i32_0 = arith.constant 0 : i32
    %c0_i32_1 = arith.constant 0 : i32
    return %c0_i32, %arg0, %c0_i32_0 : i32, i32, i32
  }
  func.func @transform_1(%arg0: i32) -> (i32, i32) {
    %c0_i32 = arith.constant 0 : i32
    %c0_i32_0 = arith.constant 0 : i32
    %c0_i32_1 = arith.constant 0 : i32
    return %c0_i32, %c0_i32_0 : i32, i32
  }
  func.func @transform_2(%arg0: i32) -> (i32, i32) {
    %c0_i32 = arith.constant 0 : i32
    %c0_i32_0 = arith.constant 0 : i32
    %c0_i32_1 = arith.constant 0 : i32
    return %c0_i32, %c0_i32_0 : i32, i32
  }
  func.func @transform_3(%arg0: i32) -> (i32, i32) {
    %c0_i32 = arith.constant 0 : i32
    %c0_i32_0 = arith.constant 0 : i32
    %c0_i32_1 = arith.constant 0 : i32
    return %c0_i32, %c0_i32_0 : i32, i32
  }
  func.func @transform_4(%arg0: i32) -> (i32, i32) {
    %c0_i32 = arith.constant 0 : i32
    %c0_i32_0 = arith.constant 0 : i32
    %c0_i32_1 = arith.constant 0 : i32
    return %c0_i32, %c0_i32_0 : i32, i32
  }
  func.func @transform_5(%arg0: i32) -> (i32, i32) {
    %c0_i32 = arith.constant 0 : i32
    %c0_i32_0 = arith.constant 0 : i32
    %c0_i32_1 = arith.constant 0 : i32
    return %c0_i32, %c0_i32_0 : i32, i32
  }
  func.func @transform_6(%arg0: i32) -> (i32, i32) {
    %c0_i32 = arith.constant 0 : i32
    %c0_i32_0 = arith.constant 0 : i32
    return %arg0, %c0_i32 : i32, i32
  }
}

</mosaic_0001>

<llo_original>
// kernel: tpu_custom_call.1
$region0: #{tpu_custom_call.1}
  #allocation0 [shape = 'u32[]', space=smem, size = 0x4, offset = 0x4, fixed_abs, tag = 'smem constant byte address 0x4 - core index']
  #allocation1 [shape = 'u32[144,128]{1,0:T(1,128)}', space=vmem, size = 0x12000, scoped, tag = 'internal scratch']
  #allocation2 [shape = 'f32[1,1]{1,0:T(1,128)S(6)}', space=smem, size = 0x200, scoped, tag = 'scoped memory for tpu_custom_call.1']
  %s0 = inlined_call_operand.hbm [shape: f32[8,8,512], index: 0, kind: input, shape index: {}]
  %s1 = inlined_call_operand.hbm [shape: f32[128,512], index: 1, kind: input, shape index: {}]
  %s2 = inlined_call_operand.vmem [shape: f32[1,128], index: 2, kind: input, shape index: {}]
  %s3 = inlined_call_operand.<no memory space> [shape: f32[1,1], index: 3, kind: input, shape index: {}]
  %s4 = inlined_call_operand.hbm [shape: f32[128,128], index: 4, kind: input, shape index: {}]
  %s5 = inlined_call_operand.vmem [shape: f32[1,128], index: 5, kind: input, shape index: {}]
  %s6 = inlined_call_operand.hbm [shape: f32[8,128], index: 6, kind: output, shape index: {}]
  %s7 = sld [smem:[#allocation0]]
  $region46: #{tpu_custom_call.1} parent=0
    _
  %s9 = ssub.s32 1, %s7
  %s10 = scalar_select 0, %s9, %s7
  %11 = sst [smem:[#allocation2]] %s3
  $region1: #{tpu_custom_call.1} parent=0
    #allocation3 [shape = 'u8[131072]{0}', space=vmem, size = 0x20000, scoped, tag = 'input window, operand 0, single buffered']
    #allocation4 [shape = 's32[1]{0}', space=sflag, size = 0x4, scoped, tag = 'scoped memory for tpu_custom_call.1']
    #allocation5 [shape = 's32[1]{0}', space=sflag, size = 0x4, scoped, tag = 'scoped memory for tpu_custom_call.1']
    #allocation6 [shape = 'u8[262144]{0}', space=vmem, size = 0x40000, scoped, tag = 'input window, operand 1, single buffered']
    #allocation7 [shape = 's32[1]{0}', space=sflag, size = 0x4, scoped, tag = 'scoped memory for tpu_custom_call.1']
    #allocation8 [shape = 'u8[65536]{0}', space=vmem, size = 0x10000, scoped, tag = 'input window, operand 4, single buffered']
    #allocation9 [shape = 'u8[4096]{0}', space=vmem, size = 0x1000, scoped, tag = 'output window, operand 0, single buffered']
    %12 = vsyncpa [#allocation4], 0
    %13 = vsyncpa [#allocation7], 0
    %14 = vsyncpa [#allocation5], 0
    // Predicated region
    $region2: #{tpu_custom_call.1} parent=1 // pred_check
      _
    $region3: #{tpu_custom_call.1} parent=1 // pred_check_branch
      %16 = sbr.rel (0) target = $region5
    $region4: #{tpu_custom_call.1} parent=1 // pred_region
      %s18 = ssub.s32 4096, 4096
      %19 = vsyncadd [#allocation4], %s18
      %s20 = sshll.u32 [#allocation3], 4
      %s21 = int_to_ptr.vmem [resolvable:$true] %s20
      %26 = dma.hbm_to_vmem [thread:$0]  %s0, 4096, %s21, [#allocation4], 512, 512, 32
    $region5: #{tpu_custom_call.1} parent=1 // pred_fallthru
      _
    // Predicated region
    $region6: #{tpu_custom_call.1} parent=1 // pred_check
      _
    $region7: #{tpu_custom_call.1} parent=1 // pred_check_branch
      %28 = sbr.rel (0) target = $region9
    $region8: #{tpu_custom_call.1} parent=1 // pred_region
      %s30 = ssub.s32 8192, 8192
      %31 = vsyncadd [#allocation7], %s30
      %s32 = sshll.u32 [#allocation6], 4
      %s33 = int_to_ptr.vmem [resolvable:$true] %s32
      %38 = dma.hbm_to_vmem [thread:$0]  %s1, 8192, %s33, [#allocation7], 512, 512, 32
    $region9: #{tpu_custom_call.1} parent=1 // pred_fallthru
      _
    // Predicated region
    $region10: #{tpu_custom_call.1} parent=1 // pred_check
      _
    $region11: #{tpu_custom_call.1} parent=1 // pred_check_branch
      %40 = sbr.rel (0) target = $region13
    $region12: #{tpu_custom_call.1} parent=1 // pred_region
      _
    $region13: #{tpu_custom_call.1} parent=1 // pred_fallthru
      _
    // Predicated region
    $region14: #{tpu_custom_call.1} parent=1 // pred_check
      _
    $region15: #{tpu_custom_call.1} parent=1 // pred_check_branch
      %42 = sbr.rel (0) target = $region17
    $region16: #{tpu_custom_call.1} parent=1 // pred_region
      _
    $region17: #{tpu_custom_call.1} parent=1 // pred_fallthru
      _
    // Predicated region
    $region18: #{tpu_custom_call.1} parent=1 // pred_check
      _
    $region19: #{tpu_custom_call.1} parent=1 // pred_check_branch
      %44 = sbr.rel (0) target = $region21
    $region20: #{tpu_custom_call.1} parent=1 // pred_region
      %s46 = ssub.s32 2048, 2048
      %47 = vsyncadd [#allocation7], %s46
      %s48 = sshll.u32 [#allocation8], 4
      %s49 = int_to_ptr.vmem [resolvable:$true] %s48
      %54 = dma.hbm_to_vmem [thread:$0]  %s4, 2048, %s49, [#allocation7], 128, 128, 8
    $region21: #{tpu_custom_call.1} parent=1 // pred_fallthru
      _
    // Predicated region
    $region22: #{tpu_custom_call.1} parent=1 // pred_check
      _
    $region23: #{tpu_custom_call.1} parent=1 // pred_check_branch
      %56 = sbr.rel (0) target = $region25
    $region24: #{tpu_custom_call.1} parent=1 // pred_region
      _
    $region25: #{tpu_custom_call.1} parent=1 // pred_fallthru
      _
    // Predicated region
    $region26: #{tpu_custom_call.1} parent=1 // pred_check
      _
    $region27: #{tpu_custom_call.1} parent=1 // pred_check_branch
      %58 = sbr.rel (0) target = $region29
    $region28: #{tpu_custom_call.1} parent=1 // pred_region
      %59 = dma.done [#allocation4], 4096
    $region29: #{tpu_custom_call.1} parent=1 // pred_fallthru
      _
    // Predicated region
    $region30: #{tpu_custom_call.1} parent=1 // pred_check
      _
    $region31: #{tpu_custom_call.1} parent=1 // pred_check_branch
      %61 = sbr.rel (0) target = $region33
    $region32: #{tpu_custom_call.1} parent=1 // pred_region
      %62 = dma.done [#allocation7], 8192
    $region33: #{tpu_custom_call.1} parent=1 // pred_fallthru
      _
    // Predicated region
    $region34: #{tpu_custom_call.1} parent=1 // pred_check
      _
    $region35: #{tpu_custom_call.1} parent=1 // pred_check_branch
      %64 = sbr.rel (0) target = $region37
    $region36: #{tpu_custom_call.1} parent=1 // pred_region
      %65 = dma.done [#allocation7], 2048
    $region37: #{tpu_custom_call.1} parent=1 // pred_fallthru
      _
    %v66 = vld [vmem:[#allocation6] sm:$0xff]
    %v67 = vld [vmem:[#allocation6 + $0x8] sm:$0xff]
    %v68 = vld [vmem:[#allocation6 + $0x10] sm:$0xff]
    %v69 = vld [vmem:[#allocation6 + $0x18] sm:$0xff]
    %v70 = vld [vmem:[#allocation6 + $0x20] sm:$0xff]
    %v71 = vld [vmem:[#allocation6 + $0x28] sm:$0xff]
    %v72 = vld [vmem:[#allocation6 + $0x30] sm:$0xff]
    %v73 = vld [vmem:[#allocation6 + $0x38] sm:$0xff]
    %v74 = vld [vmem:[#allocation6 + $0x40] sm:$0xff]
    %v75 = vld [vmem:[#allocation6 + $0x48] sm:$0xff]
    %v76 = vld [vmem:[#allocation6 + $0x50] sm:$0xff]
    %v77 = vld [vmem:[#allocation6 + $0x58] sm:$0xff]
    %v78 = vld [vmem:[#allocation6 + $0x60] sm:$0xff]
    %v79 = vld [vmem:[#allocation6 + $0x68] sm:$0xff]
    %v80 = vld [vmem:[#allocation6 + $0x70] sm:$0xff]
    %v81 = vld [vmem:[#allocation6 + $0x78] sm:$0xff]
    %v82 = vld [vmem:[#allocation6 + $0x80] sm:$0xff]
    %v83 = vld [vmem:[#allocation6 + $0x88] sm:$0xff]
    %v84 = vld [vmem:[#allocation6 + $0x90] sm:$0xff]
    %v85 = vld [vmem:[#allocation6 + $0x98] sm:$0xff]
    %v86 = vld [vmem:[#allocation6 + $0xa0] sm:$0xff]
    %v87 = vld [vmem:[#allocation6 + $0xa8] sm:$0xff]
    %v88 = vld [vmem:[#allocation6 + $0xb0] sm:$0xff]
    %v89 = vld [vmem:[#allocation6 + $0xb8] sm:$0xff]
    %v90 = vld [vmem:[#allocation6 + $0xc0] sm:$0xff]
    %v91 = vld [vmem:[#allocation6 + $0xc8] sm:$0xff]
    %v92 = vld [vmem:[#allocation6 + $0xd0] sm:$0xff]
    %v93 = vld [vmem:[#allocation6 + $0xd8] sm:$0xff]
    %v94 = vld [vmem:[#allocation6 + $0xe0] sm:$0xff]
    %v95 = vld [vmem:[#allocation6 + $0xe8] sm:$0xff]
    %v96 = vld [vmem:[#allocation6 + $0xf0] sm:$0xff]
    %v97 = vld [vmem:[#allocation6 + $0xf8] sm:$0xff]
    %v98 = vld [vmem:[#allocation6 + $0x100] sm:$0xff]
    %v99 = vld [vmem:[#allocation6 + $0x108] sm:$0xff]
    %v100 = vld [vmem:[#allocation6 + $0x110] sm:$0xff]
    %v101 = vld [vmem:[#allocation6 + $0x118] sm:$0xff]
    %v102 = vld [vmem:[#allocation6 + $0x120] sm:$0xff]
    %v103 = vld [vmem:[#allocation6 + $0x128] sm:$0xff]
    %v104 = vld [vmem:[#allocation6 + $0x130] sm:$0xff]
    %v105 = vld [vmem:[#allocation6 + $0x138] sm:$0xff]
    %v106 = vld [vmem:[#allocation6 + $0x140] sm:$0xff]
    %v107 = vld [vmem:[#allocation6 + $0x148] sm:$0xff]
    %v108 = vld [vmem:[#allocation6 + $0x150] sm:$0xff]
    %v109 = vld [vmem:[#allocation6 + $0x158] sm:$0xff]
    %v110 = vld [vmem:[#allocation6 + $0x160] sm:$0xff]
    %v111 = vld [vmem:[#allocation6 + $0x168] sm:$0xff]
    %v112 = vld [vmem:[#allocation6 + $0x170] sm:$0xff]
    %v113 = vld [vmem:[#allocation6 + $0x178] sm:$0xff]
    %v114 = vld [vmem:[#allocation6 + $0x180] sm:$0xff]
    %v115 = vld [vmem:[#allocation6 + $0x188] sm:$0xff]
    %v116 = vld [vmem:[#allocation6 + $0x190] sm:$0xff]
    %v117 = vld [vmem:[#allocation6 + $0x198] sm:$0xff]
    %v118 = vld [vmem:[#allocation6 + $0x1a0] sm:$0xff]
    %v119 = vld [vmem:[#allocation6 + $0x1a8] sm:$0xff]
    %v120 = vld [vmem:[#allocation6 + $0x1b0] sm:$0xff]
    %v121 = vld [vmem:[#allocation6 + $0x1b8] sm:$0xff]
    %v122 = vld [vmem:[#allocation6 + $0x1c0] sm:$0xff]
    %v123 = vld [vmem:[#allocation6 + $0x1c8] sm:$0xff]
    %v124 = vld [vmem:[#allocation6 + $0x1d0] sm:$0xff]
    %v125 = vld [vmem:[#allocation6 + $0x1d8] sm:$0xff]
    %v126 = vld [vmem:[#allocation6 + $0x1e0] sm:$0xff]
    %v127 = vld [vmem:[#allocation6 + $0x1e8] sm:$0xff]
    %v128 = vld [vmem:[#allocation6 + $0x1f0] sm:$0xff]
    %v129 = vld [vmem:[#allocation6 + $0x1f8] sm:$0xff]
    %v130 = vld [vmem:[%s2] sm:$0x1]
    %s131 = sld [smem:[#allocation2]]
    %v132 = vld [vmem:[#allocation3] sm:$0xff]
    %v133 = vld [vmem:[#allocation3 + $0x8] sm:$0xff]
    %v134 = vld [vmem:[#allocation3 + $0x10] sm:$0xff]
    %v135 = vld [vmem:[#allocation3 + $0x18] sm:$0xff]
    %136 = vmatprep.subr.mxu0 %v67
    %137 = vmatpush1.msra.mxu0 %v66
    %138 = vmatprep.subr.mxu0 %v71
    %139 = vmatpush1.msra.mxu0 %v70
    %140 = vmatprep.subr.mxu0 %v75
    %141 = vmatpush1.msra.mxu0 %v74
    %142 = vmatprep.subr.mxu0 %v79
    %143 = vmatpush1.msra.mxu0 %v78
    %144 = vmatprep.subr.mxu0 %v83
    %145 = vmatpush1.msra.mxu0 %v82
    %146 = vmatprep.subr.mxu0 %v87
    %147 = vmatpush1.msra.mxu0 %v86
    %148 = vmatprep.subr.mxu0 %v91
    %149 = vmatpush1.msra.mxu0 %v90
    %150 = vmatprep.subr.mxu0 %v95
    %151 = vmatpush1.msra.mxu0 %v94
    %152 = vmatprep.subr.mxu0 %v99
    %153 = vmatpush1.msra.mxu0 %v98
    %154 = vmatprep.subr.mxu0 %v103
    %155 = vmatpush1.msra.mxu0 %v102
    %156 = vmatprep.subr.mxu0 %v107
    %157 = vmatpush1.msra.mxu0 %v106
    %158 = vmatprep.subr.mxu0 %v111
    %159 = vmatpush1.msra.mxu0 %v110
    %160 = vmatprep.subr.mxu0 %v115
    %161 = vmatpush1.msra.mxu0 %v114
    %162 = vmatprep.subr.mxu0 %v119
    %163 = vmatpush1.msra.mxu0 %v118
    %164 = vmatprep.subr.mxu0 %v123
    %165 = vmatpush1.msra.mxu0 %v122
    %166 = vmatprep.subr.mxu0 %v127
    %167 = vmatpush1.msra.mxu0 %v126
    %168 = vmatprep.subr.mxu0 0.0
    %169 = vmatpush1.msra.mxu0 0.0
    %170 = vmatprep.subr.mxu0 0.0
    %171 = vmatpush1.msra.mxu0 0.0
    %172 = vmatprep.subr.mxu0 0.0
    %173 = vmatpush1.msra.mxu0 0.0
    %174 = vmatprep.subr.mxu0 0.0
    %175 = vmatpush1.msra.mxu0 0.0
    %176 = vmatprep.subr.mxu0 0.0
    %177 = vmatpush1.msra.mxu0 0.0
    %178 = vmatprep.subr.mxu0 0.0
    %179 = vmatpush1.msra.mxu0 0.0
    %180 = vmatprep.subr.mxu0 0.0
    %181 = vmatpush1.msra.mxu0 0.0
    %182 = vmatprep.subr.mxu0 0.0
    %183 = vmatpush1.msra.mxu0 0.0
    %184 = vmatprep.subr.mxu0 0.0
    %185 = vmatpush1.msra.mxu0 0.0
    %186 = vmatprep.subr.mxu0 0.0
    %187 = vmatpush1.msra.mxu0 0.0
    %188 = vmatprep.subr.mxu0 0.0
    %189 = vmatpush1.msra.mxu0 0.0
    %190 = vmatprep.subr.mxu0 0.0
    %191 = vmatpush1.msra.mxu0 0.0
    %192 = vmatprep.subr.mxu0 0.0
    %193 = vmatpush1.msra.mxu0 0.0
    %194 = vmatprep.subr.mxu0 0.0
    %195 = vmatpush1.msra.mxu0 0.0
    %196 = vmatprep.subr.mxu0 0.0
    %197 = vmatpush1.msra.mxu0 0.0
    %198 = vmatprep.subr.mxu0 0.0
    %199 = vmatpush1.msra.mxu0 0.0
    %200 = vmatprep.mubr.f32.mxu0 0.0
    %201 = vmatmul.mubr.f32.gmra.mrb[0].mxu0 0.0
    %v202 = vpop.f32.mrb[0].mxu0
    %v203 = vadd.f32 0.0, %v202
    %v204 = vpop.f32.mrb[0].mxu0
    %v205 = vadd.f32 0.0, %v204
    %206 = vdwg.mxu0
    %207 = vmatprep.subr.mxu0 %v69
    %208 = vmatpush1.msra.mxu0 %v68
    %209 = vmatprep.subr.mxu0 %v73
    %210 = vmatpush1.msra.mxu0 %v72
    %211 = vmatprep.subr.mxu0 %v77
    %212 = vmatpush1.msra.mxu0 %v76
    %213 = vmatprep.subr.mxu0 %v81
    %214 = vmatpush1.msra.mxu0 %v80
    %215 = vmatprep.subr.mxu0 %v85
    %216 = vmatpush1.msra.mxu0 %v84
    %217 = vmatprep.subr.mxu0 %v89
    %218 = vmatpush1.msra.mxu0 %v88
    %219 = vmatprep.subr.mxu0 %v93
    %220 = vmatpush1.msra.mxu0 %v92
    %221 = vmatprep.subr.mxu0 %v97
    %222 = vmatpush1.msra.mxu0 %v96
    %223 = vmatprep.subr.mxu0 %v101
    %224 = vmatpush1.msra.mxu0 %v100
    %225 = vmatprep.subr.mxu0 %v105
    %226 = vmatpush1.msra.mxu0 %v104
    %227 = vmatprep.subr.mxu0 %v109
    %228 = vmatpush1.msra.mxu0 %v108
    %229 = vmatprep.subr.mxu0 %v113
    %230 = vmatpush1.msra.mxu0 %v112
    %231 = vmatprep.subr.mxu0 %v117
    %232 = vmatpush1.msra.mxu0 %v116
    %233 = vmatprep.subr.mxu0 %v121
    %234 = vmatpush1.msra.mxu0 %v120
    %235 = vmatprep.subr.mxu0 %v125
    %236 = vmatpush1.msra.mxu0 %v124
    %237 = vmatprep.subr.mxu0 %v129
    %238 = vmatpush1.msra.mxu0 %v128
    %239 = vmatprep.subr.mxu0 0.0
    %240 = vmatpush1.msra.mxu0 0.0
    %241 = vmatprep.subr.mxu0 0.0
    %242 = vmatpush1.msra.mxu0 0.0
    %243 = vmatprep.subr.mxu0 0.0
    %244 = vmatpush1.msra.mxu0 0.0
    %245 = vmatprep.subr.mxu0 0.0
    %246 = vmatpush1.msra.mxu0 0.0
    %247 = vmatprep.subr.mxu0 0.0
    %248 = vmatpush1.msra.mxu0 0.0
    %249 = vmatprep.subr.mxu0 0.0
    %250 = vmatpush1.msra.mxu0 0.0
    %251 = vmatprep.subr.mxu0 0.0
    %252 = vmatpush1.msra.mxu0 0.0
    %253 = vmatprep.subr.mxu0 0.0
    %254 = vmatpush1.msra.mxu0 0.0
    %255 = vmatprep.subr.mxu0 0.0
    %256 = vmatpush1.msra.mxu0 0.0
    %257 = vmatprep.subr.mxu0 0.0
    %258 = vmatpush1.msra.mxu0 0.0
    %259 = vmatprep.subr.mxu0 0.0
    %260 = vmatpush1.msra.mxu0 0.0
    %261 = vmatprep.subr.mxu0 0.0
    %262 = vmatpush1.msra.mxu0 0.0
    %263 = vmatprep.subr.mxu0 0.0
    %264 = vmatpush1.msra.mxu0 0.0
    %265 = vmatprep.subr.mxu0 0.0
    %266 = vmatpush1.msra.mxu0 0.0
    %267 = vmatprep.subr.mxu0 0.0
    %268 = vmatpush1.msra.mxu0 0.0
    %269 = vmatprep.subr.mxu0 0.0
    %270 = vmatpush1.msra.mxu0 0.0
    %271 = vmatprep.mubr.f32.mxu0 0.0
    %272 = vmatmul.mubr.f32.gmra.mrb[0].mxu0 0.0
    %v273 = vpop.f32.mrb[0].mxu0
    %v274 = vadd.f32 0.0, %v273
    %v275 = vpop.f32.mrb[0].mxu0
    %v276 = vadd.f32 0.0, %v275
    %277 = vdwg.mxu0
    %v278 = vadd.f32 %v132, %v203
    %v279 = vadd.f32 %v133, %v205
    %v280 = vadd.f32 %v134, %v274
    %v281 = vadd.f32 %v135, %v276
    %v282 = vxor.u32 %v278, 2147483648
    %v283 = vmul.f32 %v282, 1.442695
    %v284 = vpow.pop %v283
    %v285 = vadd.f32 %v284, 1.0
    %v286 = vrcp.pop %v285
    %v287 = vmul.f32 1.0, %v286
    %v288 = vxor.u32 %v279, 2147483648
    %v289 = vmul.f32 %v288, 1.442695
    %v290 = vpow.pop %v289
    %v291 = vadd.f32 %v290, 1.0
    %v292 = vrcp.pop %v291
    %v293 = vmul.f32 1.0, %v292
    %v294 = vtanh.pop %v280
    %v295 = vxor.u32 %v281, 2147483648
    %v296 = vmul.f32 %v295, 1.442695
    %v297 = vpow.pop %v296
    %v298 = vadd.f32 %v297, 1.0
    %v299 = vrcp.pop %v298
    %v300 = vmul.f32 1.0, %v299
    %v301 = vmul.f32 %v293, 0.0
    %v302 = vmul.f32 %v287, %v294
    %v303 = vadd.f32 %v301, %v302
    %v304 = vtanh.pop %v303
    %v305 = vmul.f32 %v300, %v304
    %v307 = vlaneseq
    %v308 = vshrl.u32 %v307, 7
    %v309 = vsub.s32 0, %v308
    %v310 = vrot.slane %v130, %v309
    %v312 = vmul.f32 %v305, %v310
    %313 = vadd.xlane.f32.xlu0 %v312
    %v314 = vpop.xlane.xlu0 %313
    %v315 = vstv %s131
    %v316 = vadd.f32 %v314, %v315
    %v317 = vsub.f32 -inf, %v316
    %v318 = vmul.f32 %v317, 1.442695
    %v319 = vpow.pop %v318
    %v320 = vsub.f32 %v316, %v316
    %v321 = vmul.f32 %v320, 1.442695
    %v322 = vpow.pop %v321
    %v323 = vmul.f32 %v319, 0.0
    %v324 = vadd.f32 %v323, %v322
    %v325 = vmul.f32 %v322, %v305
    %v326 = vadd.f32 %v323, %v325
    %s327 = scalar_lea.vmem [#allocation3], 32
    %v328 = vld [vmem:[%s327] sm:$0xff]
    %v329 = vld [vmem:[%s327 + $0x8] sm:$0xff]
    %v330 = vld [vmem:[%s327 + $0x10] sm:$0xff]
    %v331 = vld [vmem:[%s327 + $0x18] sm:$0xff]
    %332 = vmatprep.subr.mxu0 %v67
    %333 = vmatpush1.msra.mxu0 %v66
    %334 = vmatprep.subr.mxu0 %v71
    %335 = vmatpush1.msra.mxu0 %v70
    %336 = vmatprep.subr.mxu0 %v75
    %337 = vmatpush1.msra.mxu0 %v74
    %338 = vmatprep.subr.mxu0 %v79
    %339 = vmatpush1.msra.mxu0 %v78
    %340 = vmatprep.subr.mxu0 %v83
    %341 = vmatpush1.msra.mxu0 %v82
    %342 = vmatprep.subr.mxu0 %v87
    %343 = vmatpush1.msra.mxu0 %v86
    %344 = vmatprep.subr.mxu0 %v91
    %345 = vmatpush1.msra.mxu0 %v90
    %346 = vmatprep.subr.mxu0 %v95
    %347 = vmatpush1.msra.mxu0 %v94
    %348 = vmatprep.subr.mxu0 %v99
    %349 = vmatpush1.msra.mxu0 %v98
    %350 = vmatprep.subr.mxu0 %v103
    %351 = vmatpush1.msra.mxu0 %v102
    %352 = vmatprep.subr.mxu0 %v107
    %353 = vmatpush1.msra.mxu0 %v106
    %354 = vmatprep.subr.mxu0 %v111
    %355 = vmatpush1.msra.mxu0 %v110
    %356 = vmatprep.subr.mxu0 %v115
    %357 = vmatpush1.msra.mxu0 %v114
    %358 = vmatprep.subr.mxu0 %v119
    %359 = vmatpush1.msra.mxu0 %v118
    %360 = vmatprep.subr.mxu0 %v123
    %361 = vmatpush1.msra.mxu0 %v122
    %362 = vmatprep.subr.mxu0 %v127
    %363 = vmatpush1.msra.mxu0 %v126
    %364 = vmatprep.subr.mxu0 0.0
    %365 = vmatpush1.msra.mxu0 0.0
    %366 = vmatprep.subr.mxu0 0.0
    %367 = vmatpush1.msra.mxu0 0.0
    %368 = vmatprep.subr.mxu0 0.0
    %369 = vmatpush1.msra.mxu0 0.0
    %370 = vmatprep.subr.mxu0 0.0
    %371 = vmatpush1.msra.mxu0 0.0
    %372 = vmatprep.subr.mxu0 0.0
    %373 = vmatpush1.msra.mxu0 0.0
    %374 = vmatprep.subr.mxu0 0.0
    %375 = vmatpush1.msra.mxu0 0.0
    %376 = vmatprep.subr.mxu0 0.0
    %377 = vmatpush1.msra.mxu0 0.0
    %378 = vmatprep.subr.mxu0 0.0
    %379 = vmatpush1.msra.mxu0 0.0
    %380 = vmatprep.subr.mxu0 0.0
    %381 = vmatpush1.msra.mxu0 0.0
    %382 = vmatprep.subr.mxu0 0.0
    %383 = vmatpush1.msra.mxu0 0.0
    %384 = vmatprep.subr.mxu0 0.0
    %385 = vmatpush1.msra.mxu0 0.0
    %386 = vmatprep.subr.mxu0 0.0
    %387 = vmatpush1.msra.mxu0 0.0
    %388 = vmatprep.subr.mxu0 0.0
    %389 = vmatpush1.msra.mxu0 0.0
    %390 = vmatprep.subr.mxu0 0.0
    %391 = vmatpush1.msra.mxu0 0.0
    %392 = vmatprep.subr.mxu0 0.0
    %393 = vmatpush1.msra.mxu0 0.0
    %394 = vmatprep.subr.mxu0 0.0
    %395 = vmatpush1.msra.mxu0 0.0
    %396 = vmatprep.mubr.f32.mxu0 0.0
    %397 = vmatmul.mubr.f32.gmra.mrb[0].mxu0 %v305
    %v398 = vpop.f32.mrb[0].mxu0
    %v399 = vadd.f32 0.0, %v398
    %v400 = vpop.f32.mrb[0].mxu0
    %v401 = vadd.f32 0.0, %v400
    %402 = vdwg.mxu0
    %403 = vmatprep.subr.mxu0 %v69
    %404 = vmatpush1.msra.mxu0 %v68
    %405 = vmatprep.subr.mxu0 %v73
    %406 = vmatpush1.msra.mxu0 %v72
    %407 = vmatprep.subr.mxu0 %v77
    %408 = vmatpush1.msra.mxu0 %v76
    %409 = vmatprep.subr.mxu0 %v81
    %410 = vmatpush1.msra.mxu0 %v80
    %411 = vmatprep.subr.mxu0 %v85
    %412 = vmatpush1.msra.mxu0 %v84
    %413 = vmatprep.subr.mxu0 %v89
    %414 = vmatpush1.msra.mxu0 %v88
    %415 = vmatprep.subr.mxu0 %v93
    %416 = vmatpush1.msra.mxu0 %v92
    %417 = vmatprep.subr.mxu0 %v97
    %418 = vmatpush1.msra.mxu0 %v96
    %419 = vmatprep.subr.mxu0 %v101
    %420 = vmatpush1.msra.mxu0 %v100
    %421 = vmatprep.subr.mxu0 %v105
    %422 = vmatpush1.msra.mxu0 %v104
    %423 = vmatprep.subr.mxu0 %v109
    %424 = vmatpush1.msra.mxu0 %v108
    %425 = vmatprep.subr.mxu0 %v113
    %426 = vmatpush1.msra.mxu0 %v112
    %427 = vmatprep.subr.mxu0 %v117
    %428 = vmatpush1.msra.mxu0 %v116
    %429 = vmatprep.subr.mxu0 %v121
    %430 = vmatpush1.msra.mxu0 %v120
    %431 = vmatprep.subr.mxu0 %v125
    %432 = vmatpush1.msra.mxu0 %v124
    %433 = vmatprep.subr.mxu0 %v129
    %434 = vmatpush1.msra.mxu0 %v128
    %435 = vmatprep.subr.mxu0 0.0
    %436 = vmatpush1.msra.mxu0 0.0
    %437 = vmatprep.subr.mxu0 0.0
    %438 = vmatpush1.msra.mxu0 0.0
    %439 = vmatprep.subr.mxu0 0.0
    %440 = vmatpush1.msra.mxu0 0.0
    %441 = vmatprep.subr.mxu0 0.0
    %442 = vmatpush1.msra.mxu0 0.0
    %443 = vmatprep.subr.mxu0 0.0
    %444 = vmatpush1.msra.mxu0 0.0
    %445 = vmatprep.subr.mxu0 0.0
    %446 = vmatpush1.msra.mxu0 0.0
    %447 = vmatprep.subr.mxu0 0.0
    %448 = vmatpush1.msra.mxu0 0.0
    %449 = vmatprep.subr.mxu0 0.0
    %450 = vmatpush1.msra.mxu0 0.0
    %451 = vmatprep.subr.mxu0 0.0
    %452 = vmatpush1.msra.mxu0 0.0
    %453 = vmatprep.subr.mxu0 0.0
    %454 = vmatpush1.msra.mxu0 0.0
    %455 = vmatprep.subr.mxu0 0.0
    %456 = vmatpush1.msra.mxu0 0.0
    %457 = vmatprep.subr.mxu0 0.0
    %458 = vmatpush1.msra.mxu0 0.0
    %459 = vmatprep.subr.mxu0 0.0
    %460 = vmatpush1.msra.mxu0 0.0
    %461 = vmatprep.subr.mxu0 0.0
    %462 = vmatpush1.msra.mxu0 0.0
    %463 = vmatprep.subr.mxu0 0.0
    %464 = vmatpush1.msra.mxu0 0.0
    %465 = vmatprep.subr.mxu0 0.0
    %466 = vmatpush1.msra.mxu0 0.0
    %467 = vmatprep.mubr.f32.mxu0 0.0
    %468 = vmatmul.mubr.f32.gmra.mrb[0].mxu0 %v305
    %v469 = vpop.f32.mrb[0].mxu0
    %v470 = vadd.f32 0.0, %v469
    %v471 = vpop.f32.mrb[0].mxu0
    %v472 = vadd.f32 0.0, %v471
    %473 = vdwg.mxu0
    %v474 = vadd.f32 %v328, %v399
    %v475 = vadd.f32 %v329, %v401
    %v476 = vadd.f32 %v330, %v470
    %v477 = vadd.f32 %v331, %v472
    %v478 = vxor.u32 %v474, 2147483648
    %v479 = vmul.f32 %v478, 1.442695
    %v480 = vpow.pop %v479
    %v481 = vadd.f32 %v480, 1.0
    %v482 = vrcp.pop %v481
    %v483 = vmul.f32 1.0, %v482
    %v484 = vxor.u32 %v475, 2147483648
    %v485 = vmul.f32 %v484, 1.442695
    %v486 = vpow.pop %v485
    %v487 = vadd.f32 %v486, 1.0
    %v488 = vrcp.pop %v487
    %v489 = vmul.f32 1.0, %v488
    %v490 = vtanh.pop %v476
    %v491 = vxor.u32 %v477, 2147483648
    %v492 = vmul.f32 %v491, 1.442695
    %v493 = vpow.pop %v492
    %v494 = vadd.f32 %v493, 1.0
    %v495 = vrcp.pop %v494
    %v496 = vmul.f32 1.0, %v495
    %v497 = vmul.f32 %v489, %v303
    %v498 = vmul.f32 %v483, %v490
    %v499 = vadd.f32 %v497, %v498
    %v500 = vtanh.pop %v499
    %v501 = vmul.f32 %v496, %v500
    %v502 = vmul.f32 %v501, %v310
    %503 = vadd.xlane.f32.xlu0 %v502
    %v504 = vpop.xlane.xlu0 %503
    %v505 = vadd.f32 %v504, %v315
    %v506 = vmax.f32 %v316, %v505
    %v507 = vsub.f32 %v316, %v506
    %v508 = vmul.f32 %v507, 1.442695
    %v509 = vpow.pop %v508
    %v510 = vsub.f32 %v505, %v506
    %v511 = vmul.f32 %v510, 1.442695
    %v512 = vpow.pop %v511
    %v513 = vmul.f32 %v509, %v324
    %v514 = vadd.f32 %v513, %v512
    %v515 = vmul.f32 %v509, %v326
    %v516 = vmul.f32 %v512, %v501
    %v517 = vadd.f32 %v515, %v516
    %s518 = scalar_lea.vmem [#allocation3], 64
    %v519 = vld [vmem:[%s518] sm:$0xff]
    %v520 = vld [vmem:[%s518 + $0x8] sm:$0xff]
    %v521 = vld [vmem:[%s518 + $0x10] sm:$0xff]
    %v522 = vld [vmem:[%s518 + $0x18] sm:$0xff]
    %523 = vmatprep.subr.mxu0 %v67
    %524 = vmatpush1.msra.mxu0 %v66
    %525 = vmatprep.subr.mxu0 %v71
    %526 = vmatpush1.msra.mxu0 %v70
    %527 = vmatprep.subr.mxu0 %v75
    %528 = vmatpush1.msra.mxu0 %v74
    %529 = vmatprep.subr.mxu0 %v79
    %530 = vmatpush1.msra.mxu0 %v78
    %531 = vmatprep.subr.mxu0 %v83
    %532 = vmatpush1.msra.mxu0 %v82
    %533 = vmatprep.subr.mxu0 %v87
    %534 = vmatpush1.msra.mxu0 %v86
    %535 = vmatprep.subr.mxu0 %v91
    %536 = vmatpush1.msra.mxu0 %v90
    %537 = vmatprep.subr.mxu0 %v95
    %538 = vmatpush1.msra.mxu0 %v94
    %539 = vmatprep.subr.mxu0 %v99
    %540 = vmatpush1.msra.mxu0 %v98
    %541 = vmatprep.subr.mxu0 %v103
    %542 = vmatpush1.msra.mxu0 %v102
    %543 = vmatprep.subr.mxu0 %v107
    %544 = vmatpush1.msra.mxu0 %v106
    %545 = vmatprep.subr.mxu0 %v111
    %546 = vmatpush1.msra.mxu0 %v110
    %547 = vmatprep.subr.mxu0 %v115
    %548 = vmatpush1.msra.mxu0 %v114
    %549 = vmatprep.subr.mxu0 %v119
    %550 = vmatpush1.msra.mxu0 %v118
    %551 = vmatprep.subr.mxu0 %v123
    %552 = vmatpush1.msra.mxu0 %v122
    %553 = vmatprep.subr.mxu0 %v127
    %554 = vmatpush1.msra.mxu0 %v126
    %555 = vmatprep.subr.mxu0 0.0
    %556 = vmatpush1.msra.mxu0 0.0
    %557 = vmatprep.subr.mxu0 0.0
    %558 = vmatpush1.msra.mxu0 0.0
    %559 = vmatprep.subr.mxu0 0.0
    %560 = vmatpush1.msra.mxu0 0.0
    %561 = vmatprep.subr.mxu0 0.0
    %562 = vmatpush1.msra.mxu0 0.0
    %563 = vmatprep.subr.mxu0 0.0
    %564 = vmatpush1.msra.mxu0 0.0
    %565 = vmatprep.subr.mxu0 0.0
    %566 = vmatpush1.msra.mxu0 0.0
    %567 = vmatprep.subr.mxu0 0.0
    %568 = vmatpush1.msra.mxu0 0.0
    %569 = vmatprep.subr.mxu0 0.0
    %570 = vmatpush1.msra.mxu0 0.0
    %571 = vmatprep.subr.mxu0 0.0
    %572 = vmatpush1.msra.mxu0 0.0
    %573 = vmatprep.subr.mxu0 0.0
    %574 = vmatpush1.msra.mxu0 0.0
    %575 = vmatprep.subr.mxu0 0.0
    %576 = vmatpush1.msra.mxu0 0.0
    %577 = vmatprep.subr.mxu0 0.0
    %578 = vmatpush1.msra.mxu0 0.0
    %579 = vmatprep.subr.mxu0 0.0
    %580 = vmatpush1.msra.mxu0 0.0
    %581 = vmatprep.subr.mxu0 0.0
    %582 = vmatpush1.msra.mxu0 0.0
    %583 = vmatprep.subr.mxu0 0.0
    %584 = vmatpush1.msra.mxu0 0.0
    %585 = vmatprep.subr.mxu0 0.0
    %586 = vmatpush1.msra.mxu0 0.0
    %587 = vmatprep.mubr.f32.mxu0 0.0
    %588 = vmatmul.mubr.f32.gmra.mrb[0].mxu0 %v501
    %v589 = vpop.f32.mrb[0].mxu0
    %v590 = vadd.f32 0.0, %v589
    %v591 = vpop.f32.mrb[0].mxu0
    %v592 = vadd.f32 0.0, %v591
    %593 = vdwg.mxu0
    %594 = vmatprep.subr.mxu0 %v69
    %595 = vmatpush1.msra.mxu0 %v68
    %596 = vmatprep.subr.mxu0 %v73
    %597 = vmatpush1.msra.mxu0 %v72
    %598 = vmatprep.subr.mxu0 %v77
    %599 = vmatpush1.msra.mxu0 %v76
    %600 = vmatprep.subr.mxu0 %v81
    %601 = vmatpush1.msra.mxu0 %v80
    %602 = vmatprep.subr.mxu0 %v85
    %603 = vmatpush1.msra.mxu0 %v84
    %604 = vmatprep.subr.mxu0 %v89
    %605 = vmatpush1.msra.mxu0 %v88
    %606 = vmatprep.subr.mxu0 %v93
    %607 = vmatpush1.msra.mxu0 %v92
    %608 = vmatprep.subr.mxu0 %v97
    %609 = vmatpush1.msra.mxu0 %v96
    %610 = vmatprep.subr.mxu0 %v101
    %611 = vmatpush1.msra.mxu0 %v100
    %612 = vmatprep.subr.mxu0 %v105
    %613 = vmatpush1.msra.mxu0 %v104
    %614 = vmatprep.subr.mxu0 %v109
    %615 = vmatpush1.msra.mxu0 %v108
    %616 = vmatprep.subr.mxu0 %v113
    %617 = vmatpush1.msra.mxu0 %v112
    %618 = vmatprep.subr.mxu0 %v117
    %619 = vmatpush1.msra.mxu0 %v116
    %620 = vmatprep.subr.mxu0 %v121
    %621 = vmatpush1.msra.mxu0 %v120
    %622 = vmatprep.subr.mxu0 %v125
    %623 = vmatpush1.msra.mxu0 %v124
    %624 = vmatprep.subr.mxu0 %v129
    %625 = vmatpush1.msra.mxu0 %v128
    %626 = vmatprep.subr.mxu0 0.0
    %627 = vmatpush1.msra.mxu0 0.0
    %628 = vmatprep.subr.mxu0 0.0
    %629 = vmatpush1.msra.mxu0 0.0
    %630 = vmatprep.subr.mxu0 0.0
    %631 = vmatpush1.msra.mxu0 0.0
    %632 = vmatprep.subr.mxu0 0.0
    %633 = vmatpush1.msra.mxu0 0.0
    %634 = vmatprep.subr.mxu0 0.0
    %635 = vmatpush1.msra.mxu0 0.0
    %636 = vmatprep.subr.mxu0 0.0
    %637 = vmatpush1.msra.mxu0 0.0
    %638 = vmatprep.subr.mxu0 0.0
    %639 = vmatpush1.msra.mxu0 0.0
    %640 = vmatprep.subr.mxu0 0.0
    %641 = vmatpush1.msra.mxu0 0.0
    %642 = vmatprep.subr.mxu0 0.0
    %643 = vmatpush1.msra.mxu0 0.0
    %644 = vmatprep.subr.mxu0 0.0
    %645 = vmatpush1.msra.mxu0 0.0
    %646 = vmatprep.subr.mxu0 0.0
    %647 = vmatpush1.msra.mxu0 0.0
    %648 = vmatprep.subr.mxu0 0.0
    %649 = vmatpush1.msra.mxu0 0.0
    %650 = vmatprep.subr.mxu0 0.0
    %651 = vmatpush1.msra.mxu0 0.0
    %652 = vmatprep.subr.mxu0 0.0
    %653 = vmatpush1.msra.mxu0 0.0
    %654 = vmatprep.subr.mxu0 0.0
    %655 = vmatpush1.msra.mxu0 0.0
    %656 = vmatprep.subr.mxu0 0.0
    %657 = vmatpush1.msra.mxu0 0.0
    %658 = vmatprep.mubr.f32.mxu0 0.0
    %659 = vmatmul.mubr.f32.gmra.mrb[0].mxu0 %v501
    %v660 = vpop.f32.mrb[0].mxu0
    %v661 = vadd.f32 0.0, %v660
    %v662 = vpop.f32.mrb[0].mxu0
    %v663 = vadd.f32 0.0, %v662
    %664 = vdwg.mxu0
    %v665 = vadd.f32 %v519, %v590
    %v666 = vadd.f32 %v520, %v592
    %v667 = vadd.f32 %v521, %v661
    %v668 = vadd.f32 %v522, %v663
    %v669 = vxor.u32 %v665, 2147483648
    %v670 = vmul.f32 %v669, 1.442695
    %v671 = vpow.pop %v670
    %v672 = vadd.f32 %v671, 1.0
    %v673 = vrcp.pop %v672
    %v674 = vmul.f32 1.0, %v673
    %v675 = vxor.u32 %v666, 2147483648
    %v676 = vmul.f32 %v675, 1.442695
    %v677 = vpow.pop %v676
    %v678 = vadd.f32 %v677, 1.0
    %v679 = vrcp.pop %v678
    %v680 = vmul.f32 1.0, %v679
    %v681 = vtanh.pop %v667
    %v682 = vxor.u32 %v668, 2147483648
    %v683 = vmul.f32 %v682, 1.442695
    %v684 = vpow.pop %v683
    %v685 = vadd.f32 %v684, 1.0
    %v686 = vrcp.pop %v685
    %v687 = vmul.f32 1.0, %v686
    %v688 = vmul.f32 %v680, %v499
    %v689 = vmul.f32 %v674, %v681
    %v690 = vadd.f32 %v688, %v689
    %v691 = vtanh.pop %v690
    %v692 = vmul.f32 %v687, %v691
    %v693 = vmul.f32 %v692, %v310
    %694 = vadd.xlane.f32.xlu0 %v693
    %v695 = vpop.xlane.xlu0 %694
    %v696 = vadd.f32 %v695, %v315
    %v697 = vmax.f32 %v506, %v696
    %v698 = vsub.f32 %v506, %v697
    %v699 = vmul.f32 %v698, 1.442695
    %v700 = vpow.pop %v699
    %v701 = vsub.f32 %v696, %v697
    %v702 = vmul.f32 %v701, 1.442695
    %v703 = vpow.pop %v702
    %v704 = vmul.f32 %v700, %v514
    %v705 = vadd.f32 %v704, %v703
    %v706 = vmul.f32 %v700, %v517
    %v707 = vmul.f32 %v703, %v692
    %v708 = vadd.f32 %v706, %v707
    %s709 = scalar_lea.vmem [#allocation3], 96
    %v710 = vld [vmem:[%s709] sm:$0xff]
    %v711 = vld [vmem:[%s709 + $0x8] sm:$0xff]
    %v712 = vld [vmem:[%s709 + $0x10] sm:$0xff]
    %v713 = vld [vmem:[%s709 + $0x18] sm:$0xff]
    %714 = vmatprep.subr.mxu0 %v67
    %715 = vmatpush1.msra.mxu0 %v66
    %716 = vmatprep.subr.mxu0 %v71
    %717 = vmatpush1.msra.mxu0 %v70
    %718 = vmatprep.subr.mxu0 %v75
    %719 = vmatpush1.msra.mxu0 %v74
    %720 = vmatprep.subr.mxu0 %v79
    %721 = vmatpush1.msra.mxu0 %v78
    %722 = vmatprep.subr.mxu0 %v83
    %723 = vmatpush1.msra.mxu0 %v82
    %724 = vmatprep.subr.mxu0 %v87
    %725 = vmatpush1.msra.mxu0 %v86
    %726 = vmatprep.subr.mxu0 %v91
    %727 = vmatpush1.msra.mxu0 %v90
    %728 = vmatprep.subr.mxu0 %v95
    %729 = vmatpush1.msra.mxu0 %v94
    %730 = vmatprep.subr.mxu0 %v99
    %731 = vmatpush1.msra.mxu0 %v98
    %732 = vmatprep.subr.mxu0 %v103
    %733 = vmatpush1.msra.mxu0 %v102
    %734 = vmatprep.subr.mxu0 %v107
    %735 = vmatpush1.msra.mxu0 %v106
    %736 = vmatprep.subr.mxu0 %v111
    %737 = vmatpush1.msra.mxu0 %v110
    %738 = vmatprep.subr.mxu0 %v115
    %739 = vmatpush1.msra.mxu0 %v114
    %740 = vmatprep.subr.mxu0 %v119
    %741 = vmatpush1.msra.mxu0 %v118
    %742 = vmatprep.subr.mxu0 %v123
    %743 = vmatpush1.msra.mxu0 %v122
    %744 = vmatprep.subr.mxu0 %v127
    %745 = vmatpush1.msra.mxu0 %v126
    %746 = vmatprep.subr.mxu0 0.0
    %747 = vmatpush1.msra.mxu0 0.0
    %748 = vmatprep.subr.mxu0 0.0
    %749 = vmatpush1.msra.mxu0 0.0
    %750 = vmatprep.subr.mxu0 0.0
    %751 = vmatpush1.msra.mxu0 0.0
    %752 = vmatprep.subr.mxu0 0.0
    %753 = vmatpush1.msra.mxu0 0.0
    %754 = vmatprep.subr.mxu0 0.0
    %755 = vmatpush1.msra.mxu0 0.0
    %756 = vmatprep.subr.mxu0 0.0
    %757 = vmatpush1.msra.mxu0 0.0
    %758 = vmatprep.subr.mxu0 0.0
    %759 = vmatpush1.msra.mxu0 0.0
    %760 = vmatprep.subr.mxu0 0.0
    %761 = vmatpush1.msra.mxu0 0.0
    %762 = vmatprep.subr.mxu0 0.0
    %763 = vmatpush1.msra.mxu0 0.0
    %764 = vmatprep.subr.mxu0 0.0
    %765 = vmatpush1.msra.mxu0 0.0
    %766 = vmatprep.subr.mxu0 0.0
    %767 = vmatpush1.msra.mxu0 0.0
    %768 = vmatprep.subr.mxu0 0.0
    %769 = vmatpush1.msra.mxu0 0.0
    %770 = vmatprep.subr.mxu0 0.0
    %771 = vmatpush1.msra.mxu0 0.0
    %772 = vmatprep.subr.mxu0 0.0
    %773 = vmatpush1.msra.mxu0 0.0
    %774 = vmatprep.subr.mxu0 0.0
    %775 = vmatpush1.msra.mxu0 0.0
    %776 = vmatprep.subr.mxu0 0.0
    %777 = vmatpush1.msra.mxu0 0.0
    %778 = vmatprep.mubr.f32.mxu0 0.0
    %779 = vmatmul.mubr.f32.gmra.mrb[0].mxu0 %v692
    %v780 = vpop.f32.mrb[0].mxu0
    %v781 = vadd.f32 0.0, %v780
    %v782 = vpop.f32.mrb[0].mxu0
    %v783 = vadd.f32 0.0, %v782
    %784 = vdwg.mxu0
    %785 = vmatprep.subr.mxu0 %v69
    %786 = vmatpush1.msra.mxu0 %v68
    %787 = vmatprep.subr.mxu0 %v73
    %788 = vmatpush1.msra.mxu0 %v72
    %789 = vmatprep.subr.mxu0 %v77
    %790 = vmatpush1.msra.mxu0 %v76
    %791 = vmatprep.subr.mxu0 %v81
    %792 = vmatpush1.msra.mxu0 %v80
    %793 = vmatprep.subr.mxu0 %v85
    %794 = vmatpush1.msra.mxu0 %v84
    %795 = vmatprep.subr.mxu0 %v89
    %796 = vmatpush1.msra.mxu0 %v88
    %797 = vmatprep.subr.mxu0 %v93
    %798 = vmatpush1.msra.mxu0 %v92
    %799 = vmatprep.subr.mxu0 %v97
    %800 = vmatpush1.msra.mxu0 %v96
    %801 = vmatprep.subr.mxu0 %v101
    %802 = vmatpush1.msra.mxu0 %v100
    %803 = vmatprep.subr.mxu0 %v105
    %804 = vmatpush1.msra.mxu0 %v104
    %805 = vmatprep.subr.mxu0 %v109
    %806 = vmatpush1.msra.mxu0 %v108
    %807 = vmatprep.subr.mxu0 %v113
    %808 = vmatpush1.msra.mxu0 %v112
    %809 = vmatprep.subr.mxu0 %v117
    %810 = vmatpush1.msra.mxu0 %v116
    %811 = vmatprep.subr.mxu0 %v121
    %812 = vmatpush1.msra.mxu0 %v120
    %813 = vmatprep.subr.mxu0 %v125
    %814 = vmatpush1.msra.mxu0 %v124
    %815 = vmatprep.subr.mxu0 %v129
    %816 = vmatpush1.msra.mxu0 %v128
    %817 = vmatprep.subr.mxu0 0.0
    %818 = vmatpush1.msra.mxu0 0.0
    %819 = vmatprep.subr.mxu0 0.0
    %820 = vmatpush1.msra.mxu0 0.0
    %821 = vmatprep.subr.mxu0 0.0
    %822 = vmatpush1.msra.mxu0 0.0
    %823 = vmatprep.subr.mxu0 0.0
    %824 = vmatpush1.msra.mxu0 0.0
    %825 = vmatprep.subr.mxu0 0.0
    %826 = vmatpush1.msra.mxu0 0.0
    %827 = vmatprep.subr.mxu0 0.0
    %828 = vmatpush1.msra.mxu0 0.0
    %829 = vmatprep.subr.mxu0 0.0
    %830 = vmatpush1.msra.mxu0 0.0
    %831 = vmatprep.subr.mxu0 0.0
    %832 = vmatpush1.msra.mxu0 0.0
    %833 = vmatprep.subr.mxu0 0.0
    %834 = vmatpush1.msra.mxu0 0.0
    %835 = vmatprep.subr.mxu0 0.0
    %836 = vmatpush1.msra.mxu0 0.0
    %837 = vmatprep.subr.mxu0 0.0
    %838 = vmatpush1.msra.mxu0 0.0
    %839 = vmatprep.subr.mxu0 0.0
    %840 = vmatpush1.msra.mxu0 0.0
    %841 = vmatprep.subr.mxu0 0.0
    %842 = vmatpush1.msra.mxu0 0.0
    %843 = vmatprep.subr.mxu0 0.0
    %844 = vmatpush1.msra.mxu0 0.0
    %845 = vmatprep.subr.mxu0 0.0
    %846 = vmatpush1.msra.mxu0 0.0
    %847 = vmatprep.subr.mxu0 0.0
    %848 = vmatpush1.msra.mxu0 0.0
    %849 = vmatprep.mubr.f32.mxu0 0.0
    %850 = vmatmul.mubr.f32.gmra.mrb[0].mxu0 %v692
    %v851 = vpop.f32.mrb[0].mxu0
    %v852 = vadd.f32 0.0, %v851
    %v853 = vpop.f32.mrb[0].mxu0
    %v854 = vadd.f32 0.0, %v853
    %855 = vdwg.mxu0
    %v856 = vadd.f32 %v710, %v781
    %v857 = vadd.f32 %v711, %v783
    %v858 = vadd.f32 %v712, %v852
    %v859 = vadd.f32 %v713, %v854
    %v860 = vxor.u32 %v856, 2147483648
    %v861 = vmul.f32 %v860, 1.442695
    %v862 = vpow.pop %v861
    %v863 = vadd.f32 %v862, 1.0
    %v864 = vrcp.pop %v863
    %v865 = vmul.f32 1.0, %v864
    %v866 = vxor.u32 %v857, 2147483648
    %v867 = vmul.f32 %v866, 1.442695
    %v868 = vpow.pop %v867
    %v869 = vadd.f32 %v868, 1.0
    %v870 = vrcp.pop %v869
    %v871 = vmul.f32 1.0, %v870
    %v872 = vtanh.pop %v858
    %v873 = vxor.u32 %v859, 2147483648
    %v874 = vmul.f32 %v873, 1.442695
    %v875 = vpow.pop %v874
    %v876 = vadd.f32 %v875, 1.0
    %v877 = vrcp.pop %v876
    %v878 = vmul.f32 1.0, %v877
    %v879 = vmul.f32 %v871, %v690
    %v880 = vmul.f32 %v865, %v872
    %v881 = vadd.f32 %v879, %v880
    %v882 = vtanh.pop %v881
    %v883 = vmul.f32 %v878, %v882
    %v884 = vmul.f32 %v883, %v310
    %885 = vadd.xlane.f32.xlu0 %v884
    %v886 = vpop.xlane.xlu0 %885
    %v887 = vadd.f32 %v886, %v315
    %v888 = vmax.f32 %v697, %v887
    %v889 = vsub.f32 %v697, %v888
    %v890 = vmul.f32 %v889, 1.442695
    %v891 = vpow.pop %v890
    %v892 = vsub.f32 %v887, %v888
    %v893 = vmul.f32 %v892, 1.442695
    %v894 = vpow.pop %v893
    %v895 = vmul.f32 %v891, %v705
    %v896 = vadd.f32 %v895, %v894
    %v897 = vmul.f32 %v891, %v708
    %v898 = vmul.f32 %v894, %v883
    %v899 = vadd.f32 %v897, %v898
    %s900 = scalar_lea.vmem [#allocation3], 128
    %v901 = vld [vmem:[%s900] sm:$0xff]
    %v902 = vld [vmem:[%s900 + $0x8] sm:$0xff]
    %v903 = vld [vmem:[%s900 + $0x10] sm:$0xff]
    %v904 = vld [vmem:[%s900 + $0x18] sm:$0xff]
    %905 = vmatprep.subr.mxu0 %v67
    %906 = vmatpush1.msra.mxu0 %v66
    %907 = vmatprep.subr.mxu0 %v71
    %908 = vmatpush1.msra.mxu0 %v70
    %909 = vmatprep.subr.mxu0 %v75
    %910 = vmatpush1.msra.mxu0 %v74
    %911 = vmatprep.subr.mxu0 %v79
    %912 = vmatpush1.msra.mxu0 %v78
    %913 = vmatprep.subr.mxu0 %v83
    %914 = vmatpush1.msra.mxu0 %v82
    %915 = vmatprep.subr.mxu0 %v87
    %916 = vmatpush1.msra.mxu0 %v86
    %917 = vmatprep.subr.mxu0 %v91
    %918 = vmatpush1.msra.mxu0 %v90
    %919 = vmatprep.subr.mxu0 %v95
    %920 = vmatpush1.msra.mxu0 %v94
    %921 = vmatprep.subr.mxu0 %v99
    %922 = vmatpush1.msra.mxu0 %v98
    %923 = vmatprep.subr.mxu0 %v103
    %924 = vmatpush1.msra.mxu0 %v102
    %925 = vmatprep.subr.mxu0 %v107
    %926 = vmatpush1.msra.mxu0 %v106
    %927 = vmatprep.subr.mxu0 %v111
    %928 = vmatpush1.msra.mxu0 %v110
    %929 = vmatprep.subr.mxu0 %v115
    %930 = vmatpush1.msra.mxu0 %v114
    %931 = vmatprep.subr.mxu0 %v119
    %932 = vmatpush1.msra.mxu0 %v118
    %933 = vmatprep.subr.mxu0 %v123
    %934 = vmatpush1.msra.mxu0 %v122
    %935 = vmatprep.subr.mxu0 %v127
    %936 = vmatpush1.msra.mxu0 %v126
    %937 = vmatprep.subr.mxu0 0.0
    %938 = vmatpush1.msra.mxu0 0.0
    %939 = vmatprep.subr.mxu0 0.0
    %940 = vmatpush1.msra.mxu0 0.0
    %941 = vmatprep.subr.mxu0 0.0
    %942 = vmatpush1.msra.mxu0 0.0
    %943 = vmatprep.subr.mxu0 0.0
    %944 = vmatpush1.msra.mxu0 0.0
    %945 = vmatprep.subr.mxu0 0.0
    %946 = vmatpush1.msra.mxu0 0.0
    %947 = vmatprep.subr.mxu0 0.0
    %948 = vmatpush1.msra.mxu0 0.0
    %949 = vmatprep.subr.mxu0 0.0
    %950 = vmatpush1.msra.mxu0 0.0
    %951 = vmatprep.subr.mxu0 0.0
    %952 = vmatpush1.msra.mxu0 0.0
    %953 = vmatprep.subr.mxu0 0.0
    %954 = vmatpush1.msra.mxu0 0.0
    %955 = vmatprep.subr.mxu0 0.0
    %956 = vmatpush1.msra.mxu0 0.0
    %957 = vmatprep.subr.mxu0 0.0
    %958 = vmatpush1.msra.mxu0 0.0
    %959 = vmatprep.subr.mxu0 0.0
    %960 = vmatpush1.msra.mxu0 0.0
    %961 = vmatprep.subr.mxu0 0.0
    %962 = vmatpush1.msra.mxu0 0.0
    %963 = vmatprep.subr.mxu0 0.0
    %964 = vmatpush1.msra.mxu0 0.0
    %965 = vmatprep.subr.mxu0 0.0
    %966 = vmatpush1.msra.mxu0 0.0
    %967 = vmatprep.subr.mxu0 0.0
    %968 = vmatpush1.msra.mxu0 0.0
    %969 = vmatprep.mubr.f32.mxu0 0.0
    %970 = vmatmul.mubr.f32.gmra.mrb[0].mxu0 %v883
    %v971 = vpop.f32.mrb[0].mxu0
    %v972 = vadd.f32 0.0, %v971
    %v973 = vpop.f32.mrb[0].mxu0
    %v974 = vadd.f32 0.0, %v973
    %975 = vdwg.mxu0
    %976 = vmatprep.subr.mxu0 %v69
    %977 = vmatpush1.msra.mxu0 %v68
    %978 = vmatprep.subr.mxu0 %v73
    %979 = vmatpush1.msra.mxu0 %v72
    %980 = vmatprep.subr.mxu0 %v77
    %981 = vmatpush1.msra.mxu0 %v76
    %982 = vmatprep.subr.mxu0 %v81
    %983 = vmatpush1.msra.mxu0 %v80
    %984 = vmatprep.subr.mxu0 %v85
    %985 = vmatpush1.msra.mxu0 %v84
    %986 = vmatprep.subr.mxu0 %v89
    %987 = vmatpush1.msra.mxu0 %v88
    %988 = vmatprep.subr.mxu0 %v93
    %989 = vmatpush1.msra.mxu0 %v92
    %990 = vmatprep.subr.mxu0 %v97
    %991 = vmatpush1.msra.mxu0 %v96
    %992 = vmatprep.subr.mxu0 %v101
    %993 = vmatpush1.msra.mxu0 %v100
    %994 = vmatprep.subr.mxu0 %v105
    %995 = vmatpush1.msra.mxu0 %v104
    %996 = vmatprep.subr.mxu0 %v109
    %997 = vmatpush1.msra.mxu0 %v108
    %998 = vmatprep.subr.mxu0 %v113
    %999 = vmatpush1.msra.mxu0 %v112
    %1000 = vmatprep.subr.mxu0 %v117
    %1001 = vmatpush1.msra.mxu0 %v116
    %1002 = vmatprep.subr.mxu0 %v121
    %1003 = vmatpush1.msra.mxu0 %v120
    %1004 = vmatprep.subr.mxu0 %v125
    %1005 = vmatpush1.msra.mxu0 %v124
    %1006 = vmatprep.subr.mxu0 %v129
    %1007 = vmatpush1.msra.mxu0 %v128
    %1008 = vmatprep.subr.mxu0 0.0
    %1009 = vmatpush1.msra.mxu0 0.0
    %1010 = vmatprep.subr.mxu0 0.0
    %1011 = vmatpush1.msra.mxu0 0.0
    %1012 = vmatprep.subr.mxu0 0.0
    %1013 = vmatpush1.msra.mxu0 0.0
    %1014 = vmatprep.subr.mxu0 0.0
    %1015 = vmatpush1.msra.mxu0 0.0
    %1016 = vmatprep.subr.mxu0 0.0
    %1017 = vmatpush1.msra.mxu0 0.0
    %1018 = vmatprep.subr.mxu0 0.0
    %1019 = vmatpush1.msra.mxu0 0.0
    %1020 = vmatprep.subr.mxu0 0.0
    %1021 = vmatpush1.msra.mxu0 0.0
    %1022 = vmatprep.subr.mxu0 0.0
    %1023 = vmatpush1.msra.mxu0 0.0
    %1024 = vmatprep.subr.mxu0 0.0
    %1025 = vmatpush1.msra.mxu0 0.0
    %1026 = vmatprep.subr.mxu0 0.0
    %1027 = vmatpush1.msra.mxu0 0.0
    %1028 = vmatprep.subr.mxu0 0.0
    %1029 = vmatpush1.msra.mxu0 0.0
    %1030 = vmatprep.subr.mxu0 0.0
    %1031 = vmatpush1.msra.mxu0 0.0
    %1032 = vmatprep.subr.mxu0 0.0
    %1033 = vmatpush1.msra.mxu0 0.0
    %1034 = vmatprep.subr.mxu0 0.0
    %1035 = vmatpush1.msra.mxu0 0.0
    %1036 = vmatprep.subr.mxu0 0.0
    %1037 = vmatpush1.msra.mxu0 0.0
    %1038 = vmatprep.subr.mxu0 0.0
    %1039 = vmatpush1.msra.mxu0 0.0
    %1040 = vmatprep.mubr.f32.mxu0 0.0
    %1041 = vmatmul.mubr.f32.gmra.mrb[0].mxu0 %v883
    %v1042 = vpop.f32.mrb[0].mxu0
    %v1043 = vadd.f32 0.0, %v1042
    %v1044 = vpop.f32.mrb[0].mxu0
    %v1045 = vadd.f32 0.0, %v1044
    %1046 = vdwg.mxu0
    %v1047 = vadd.f32 %v901, %v972
    %v1048 = vadd.f32 %v902, %v974
    %v1049 = vadd.f32 %v903, %v1043
    %v1050 = vadd.f32 %v904, %v1045
    %v1051 = vxor.u32 %v1047, 2147483648
    %v1052 = vmul.f32 %v1051, 1.442695
    %v1053 = vpow.pop %v1052
    %v1054 = vadd.f32 %v1053, 1.0
    %v1055 = vrcp.pop %v1054
    %v1056 = vmul.f32 1.0, %v1055
    %v1057 = vxor.u32 %v1048, 2147483648
    %v1058 = vmul.f32 %v1057, 1.442695
    %v1059 = vpow.pop %v1058
    %v1060 = vadd.f32 %v1059, 1.0
    %v1061 = vrcp.pop %v1060
    %v1062 = vmul.f32 1.0, %v1061
    %v1063 = vtanh.pop %v1049
    %v1064 = vxor.u32 %v1050, 2147483648
    %v1065 = vmul.f32 %v1064, 1.442695
    %v1066 = vpow.pop %v1065
    %v1067 = vadd.f32 %v1066, 1.0
    %v1068 = vrcp.pop %v1067
    %v1069 = vmul.f32 1.0, %v1068
    %v1070 = vmul.f32 %v1062, %v881
    %v1071 = vmul.f32 %v1056, %v1063
    %v1072 = vadd.f32 %v1070, %v1071
    %v1073 = vtanh.pop %v1072
    %v1074 = vmul.f32 %v1069, %v1073
    %v1075 = vmul.f32 %v1074, %v310
    %1076 = vadd.xlane.f32.xlu0 %v1075
    %v1077 = vpop.xlane.xlu0 %1076
    %v1078 = vadd.f32 %v1077, %v315
    %v1079 = vmax.f32 %v888, %v1078
    %v1080 = vsub.f32 %v888, %v1079
    %v1081 = vmul.f32 %v1080, 1.442695
    %v1082 = vpow.pop %v1081
    %v1083 = vsub.f32 %v1078, %v1079
    %v1084 = vmul.f32 %v1083, 1.442695
    %v1085 = vpow.pop %v1084
    %v1086 = vmul.f32 %v1082, %v896
    %v1087 = vadd.f32 %v1086, %v1085
    %v1088 = vmul.f32 %v1082, %v899
    %v1089 = vmul.f32 %v1085, %v1074
    %v1090 = vadd.f32 %v1088, %v1089
    %s1091 = scalar_lea.vmem [#allocation3], 160
    %v1092 = vld [vmem:[%s1091] sm:$0xff]
    %v1093 = vld [vmem:[%s1091 + $0x8] sm:$0xff]
    %v1094 = vld [vmem:[%s1091 + $0x10] sm:$0xff]
    %v1095 = vld [vmem:[%s1091 + $0x18] sm:$0xff]
    %1096 = vmatprep.subr.mxu0 %v67
    %1097 = vmatpush1.msra.mxu0 %v66
    %1098 = vmatprep.subr.mxu0 %v71
    %1099 = vmatpush1.msra.mxu0 %v70
    %1100 = vmatprep.subr.mxu0 %v75
    %1101 = vmatpush1.msra.mxu0 %v74
    %1102 = vmatprep.subr.mxu0 %v79
    %1103 = vmatpush1.msra.mxu0 %v78
    %1104 = vmatprep.subr.mxu0 %v83
    %1105 = vmatpush1.msra.mxu0 %v82
    %1106 = vmatprep.subr.mxu0 %v87
    %1107 = vmatpush1.msra.mxu0 %v86
    %1108 = vmatprep.subr.mxu0 %v91
    %1109 = vmatpush1.msra.mxu0 %v90
    %1110 = vmatprep.subr.mxu0 %v95
    %1111 = vmatpush1.msra.mxu0 %v94
    %1112 = vmatprep.subr.mxu0 %v99
    %1113 = vmatpush1.msra.mxu0 %v98
    %1114 = vmatprep.subr.mxu0 %v103
    %1115 = vmatpush1.msra.mxu0 %v102
    %1116 = vmatprep.subr.mxu0 %v107
    %1117 = vmatpush1.msra.mxu0 %v106
    %1118 = vmatprep.subr.mxu0 %v111
    %1119 = vmatpush1.msra.mxu0 %v110
    %1120 = vmatprep.subr.mxu0 %v115
    %1121 = vmatpush1.msra.mxu0 %v114
    %1122 = vmatprep.subr.mxu0 %v119
    %1123 = vmatpush1.msra.mxu0 %v118
    %1124 = vmatprep.subr.mxu0 %v123
    %1125 = vmatpush1.msra.mxu0 %v122
    %1126 = vmatprep.subr.mxu0 %v127
    %1127 = vmatpush1.msra.mxu0 %v126
    %1128 = vmatprep.subr.mxu0 0.0
    %1129 = vmatpush1.msra.mxu0 0.0
    %1130 = vmatprep.subr.mxu0 0.0
    %1131 = vmatpush1.msra.mxu0 0.0
    %1132 = vmatprep.subr.mxu0 0.0
    %1133 = vmatpush1.msra.mxu0 0.0
    %1134 = vmatprep.subr.mxu0 0.0
    %1135 = vmatpush1.msra.mxu0 0.0
    %1136 = vmatprep.subr.mxu0 0.0
    %1137 = vmatpush1.msra.mxu0 0.0
    %1138 = vmatprep.subr.mxu0 0.0
    %1139 = vmatpush1.msra.mxu0 0.0
    %1140 = vmatprep.subr.mxu0 0.0
    %1141 = vmatpush1.msra.mxu0 0.0
    %1142 = vmatprep.subr.mxu0 0.0
    %1143 = vmatpush1.msra.mxu0 0.0
    %1144 = vmatprep.subr.mxu0 0.0
    %1145 = vmatpush1.msra.mxu0 0.0
    %1146 = vmatprep.subr.mxu0 0.0
    %1147 = vmatpush1.msra.mxu0 0.0
    %1148 = vmatprep.subr.mxu0 0.0
    %1149 = vmatpush1.msra.mxu0 0.0
    %1150 = vmatprep.subr.mxu0 0.0
    %1151 = vmatpush1.msra.mxu0 0.0
    %1152 = vmatprep.subr.mxu0 0.0
    %1153 = vmatpush1.msra.mxu0 0.0
    %1154 = vmatprep.subr.mxu0 0.0
    %1155 = vmatpush1.msra.mxu0 0.0
    %1156 = vmatprep.subr.mxu0 0.0
    %1157 = vmatpush1.msra.mxu0 0.0
    %1158 = vmatprep.subr.mxu0 0.0
    %1159 = vmatpush1.msra.mxu0 0.0
    %1160 = vmatprep.mubr.f32.mxu0 0.0
    %1161 = vmatmul.mubr.f32.gmra.mrb[0].mxu0 %v1074
    %v1162 = vpop.f32.mrb[0].mxu0
    %v1163 = vadd.f32 0.0, %v1162
    %v1164 = vpop.f32.mrb[0].mxu0
    %v1165 = vadd.f32 0.0, %v1164
    %1166 = vdwg.mxu0
    %1167 = vmatprep.subr.mxu0 %v69
    %1168 = vmatpush1.msra.mxu0 %v68
    %1169 = vmatprep.subr.mxu0 %v73
    %1170 = vmatpush1.msra.mxu0 %v72
    %1171 = vmatprep.subr.mxu0 %v77
    %1172 = vmatpush1.msra.mxu0 %v76
    %1173 = vmatprep.subr.mxu0 %v81
    %1174 = vmatpush1.msra.mxu0 %v80
    %1175 = vmatprep.subr.mxu0 %v85
    %1176 = vmatpush1.msra.mxu0 %v84
    %1177 = vmatprep.subr.mxu0 %v89
    %1178 = vmatpush1.msra.mxu0 %v88
    %1179 = vmatprep.subr.mxu0 %v93
    %1180 = vmatpush1.msra.mxu0 %v92
    %1181 = vmatprep.subr.mxu0 %v97
    %1182 = vmatpush1.msra.mxu0 %v96
    %1183 = vmatprep.subr.mxu0 %v101
    %1184 = vmatpush1.msra.mxu0 %v100
    %1185 = vmatprep.subr.mxu0 %v105
    %1186 = vmatpush1.msra.mxu0 %v104
    %1187 = vmatprep.subr.mxu0 %v109
    %1188 = vmatpush1.msra.mxu0 %v108
    %1189 = vmatprep.subr.mxu0 %v113
    %1190 = vmatpush1.msra.mxu0 %v112
    %1191 = vmatprep.subr.mxu0 %v117
    %1192 = vmatpush1.msra.mxu0 %v116
    %1193 = vmatprep.subr.mxu0 %v121
    %1194 = vmatpush1.msra.mxu0 %v120
    %1195 = vmatprep.subr.mxu0 %v125
    %1196 = vmatpush1.msra.mxu0 %v124
    %1197 = vmatprep.subr.mxu0 %v129
    %1198 = vmatpush1.msra.mxu0 %v128
    %1199 = vmatprep.subr.mxu0 0.0
    %1200 = vmatpush1.msra.mxu0 0.0
    %1201 = vmatprep.subr.mxu0 0.0
    %1202 = vmatpush1.msra.mxu0 0.0
    %1203 = vmatprep.subr.mxu0 0.0
    %1204 = vmatpush1.msra.mxu0 0.0
    %1205 = vmatprep.subr.mxu0 0.0
    %1206 = vmatpush1.msra.mxu0 0.0
    %1207 = vmatprep.subr.mxu0 0.0
    %1208 = vmatpush1.msra.mxu0 0.0
    %1209 = vmatprep.subr.mxu0 0.0
    %1210 = vmatpush1.msra.mxu0 0.0
    %1211 = vmatprep.subr.mxu0 0.0
    %1212 = vmatpush1.msra.mxu0 0.0
    %1213 = vmatprep.subr.mxu0 0.0
    %1214 = vmatpush1.msra.mxu0 0.0
    %1215 = vmatprep.subr.mxu0 0.0
    %1216 = vmatpush1.msra.mxu0 0.0
    %1217 = vmatprep.subr.mxu0 0.0
    %1218 = vmatpush1.msra.mxu0 0.0
    %1219 = vmatprep.subr.mxu0 0.0
    %1220 = vmatpush1.msra.mxu0 0.0
    %1221 = vmatprep.subr.mxu0 0.0
    %1222 = vmatpush1.msra.mxu0 0.0
    %1223 = vmatprep.subr.mxu0 0.0
    %1224 = vmatpush1.msra.mxu0 0.0
    %1225 = vmatprep.subr.mxu0 0.0
    %1226 = vmatpush1.msra.mxu0 0.0
    %1227 = vmatprep.subr.mxu0 0.0
    %1228 = vmatpush1.msra.mxu0 0.0
    %1229 = vmatprep.subr.mxu0 0.0
    %1230 = vmatpush1.msra.mxu0 0.0
    %1231 = vmatprep.mubr.f32.mxu0 0.0
    %1232 = vmatmul.mubr.f32.gmra.mrb[0].mxu0 %v1074
    %v1233 = vpop.f32.mrb[0].mxu0
    %v1234 = vadd.f32 0.0, %v1233
    %v1235 = vpop.f32.mrb[0].mxu0
    %v1236 = vadd.f32 0.0, %v1235
    %1237 = vdwg.mxu0
    %v1238 = vadd.f32 %v1092, %v1163
    %v1239 = vadd.f32 %v1093, %v1165
    %v1240 = vadd.f32 %v1094, %v1234
    %v1241 = vadd.f32 %v1095, %v1236
    %v1242 = vxor.u32 %v1238, 2147483648
    %v1243 = vmul.f32 %v1242, 1.442695
    %v1244 = vpow.pop %v1243
    %v1245 = vadd.f32 %v1244, 1.0
    %v1246 = vrcp.pop %v1245
    %v1247 = vmul.f32 1.0, %v1246
    %v1248 = vxor.u32 %v1239, 2147483648
    %v1249 = vmul.f32 %v1248, 1.442695
    %v1250 = vpow.pop %v1249
    %v1251 = vadd.f32 %v1250, 1.0
    %v1252 = vrcp.pop %v1251
    %v1253 = vmul.f32 1.0, %v1252
    %v1254 = vtanh.pop %v1240
    %v1255 = vxor.u32 %v1241, 2147483648
    %v1256 = vmul.f32 %v1255, 1.442695
    %v1257 = vpow.pop %v1256
    %v1258 = vadd.f32 %v1257, 1.0
    %v1259 = vrcp.pop %v1258
    %v1260 = vmul.f32 1.0, %v1259
    %v1261 = vmul.f32 %v1253, %v1072
    %v1262 = vmul.f32 %v1247, %v1254
    %v1263 = vadd.f32 %v1261, %v1262
    %v1264 = vtanh.pop %v1263
    %v1265 = vmul.f32 %v1260, %v1264
    %v1266 = vmul.f32 %v1265, %v310
    %1267 = vadd.xlane.f32.xlu0 %v1266
    %v1268 = vpop.xlane.xlu0 %1267
    %v1269 = vadd.f32 %v1268, %v315
    %v1270 = vmax.f32 %v1079, %v1269
    %v1271 = vsub.f32 %v1079, %v1270
    %v1272 = vmul.f32 %v1271, 1.442695
    %v1273 = vpow.pop %v1272
    %v1274 = vsub.f32 %v1269, %v1270
    %v1275 = vmul.f32 %v1274, 1.442695
    %v1276 = vpow.pop %v1275
    %v1277 = vmul.f32 %v1273, %v1087
    %v1278 = vadd.f32 %v1277, %v1276
    %v1279 = vmul.f32 %v1273, %v1090
    %v1280 = vmul.f32 %v1276, %v1265
    %v1281 = vadd.f32 %v1279, %v1280
    %s1282 = scalar_lea.vmem [#allocation3], 192
    %v1283 = vld [vmem:[%s1282] sm:$0xff]
    %v1284 = vld [vmem:[%s1282 + $0x8] sm:$0xff]
    %v1285 = vld [vmem:[%s1282 + $0x10] sm:$0xff]
    %v1286 = vld [vmem:[%s1282 + $0x18] sm:$0xff]
    %1287 = vmatprep.subr.mxu0 %v67
    %1288 = vmatpush1.msra.mxu0 %v66
    %1289 = vmatprep.subr.mxu0 %v71
    %1290 = vmatpush1.msra.mxu0 %v70
    %1291 = vmatprep.subr.mxu0 %v75
    %1292 = vmatpush1.msra.mxu0 %v74
    %1293 = vmatprep.subr.mxu0 %v79
    %1294 = vmatpush1.msra.mxu0 %v78
    %1295 = vmatprep.subr.mxu0 %v83
    %1296 = vmatpush1.msra.mxu0 %v82
    %1297 = vmatprep.subr.mxu0 %v87
    %1298 = vmatpush1.msra.mxu0 %v86
    %1299 = vmatprep.subr.mxu0 %v91
    %1300 = vmatpush1.msra.mxu0 %v90
    %1301 = vmatprep.subr.mxu0 %v95
    %1302 = vmatpush1.msra.mxu0 %v94
    %1303 = vmatprep.subr.mxu0 %v99
    %1304 = vmatpush1.msra.mxu0 %v98
    %1305 = vmatprep.subr.mxu0 %v103
    %1306 = vmatpush1.msra.mxu0 %v102
    %1307 = vmatprep.subr.mxu0 %v107
    %1308 = vmatpush1.msra.mxu0 %v106
    %1309 = vmatprep.subr.mxu0 %v111
    %1310 = vmatpush1.msra.mxu0 %v110
    %1311 = vmatprep.subr.mxu0 %v115
    %1312 = vmatpush1.msra.mxu0 %v114
    %1313 = vmatprep.subr.mxu0 %v119
    %1314 = vmatpush1.msra.mxu0 %v118
    %1315 = vmatprep.subr.mxu0 %v123
    %1316 = vmatpush1.msra.mxu0 %v122
    %1317 = vmatprep.subr.mxu0 %v127
    %1318 = vmatpush1.msra.mxu0 %v126
    %1319 = vmatprep.subr.mxu0 0.0
    %1320 = vmatpush1.msra.mxu0 0.0
    %1321 = vmatprep.subr.mxu0 0.0
    %1322 = vmatpush1.msra.mxu0 0.0
    %1323 = vmatprep.subr.mxu0 0.0
    %1324 = vmatpush1.msra.mxu0 0.0
    %1325 = vmatprep.subr.mxu0 0.0
    %1326 = vmatpush1.msra.mxu0 0.0
    %1327 = vmatprep.subr.mxu0 0.0
    %1328 = vmatpush1.msra.mxu0 0.0
    %1329 = vmatprep.subr.mxu0 0.0
    %1330 = vmatpush1.msra.mxu0 0.0
    %1331 = vmatprep.subr.mxu0 0.0
    %1332 = vmatpush1.msra.mxu0 0.0
    %1333 = vmatprep.subr.mxu0 0.0
    %1334 = vmatpush1.msra.mxu0 0.0
    %1335 = vmatprep.subr.mxu0 0.0
    %1336 = vmatpush1.msra.mxu0 0.0
    %1337 = vmatprep.subr.mxu0 0.0
    %1338 = vmatpush1.msra.mxu0 0.0
    %1339 = vmatprep.subr.mxu0 0.0
    %1340 = vmatpush1.msra.mxu0 0.0
    %1341 = vmatprep.subr.mxu0 0.0
    %1342 = vmatpush1.msra.mxu0 0.0
    %1343 = vmatprep.subr.mxu0 0.0
    %1344 = vmatpush1.msra.mxu0 0.0
    %1345 = vmatprep.subr.mxu0 0.0
    %1346 = vmatpush1.msra.mxu0 0.0
    %1347 = vmatprep.subr.mxu0 0.0
    %1348 = vmatpush1.msra.mxu0 0.0
    %1349 = vmatprep.subr.mxu0 0.0
    %1350 = vmatpush1.msra.mxu0 0.0
    %1351 = vmatprep.mubr.f32.mxu0 0.0
    %1352 = vmatmul.mubr.f32.gmra.mrb[0].mxu0 %v1265
    %v1353 = vpop.f32.mrb[0].mxu0
    %v1354 = vadd.f32 0.0, %v1353
    %v1355 = vpop.f32.mrb[0].mxu0
    %v1356 = vadd.f32 0.0, %v1355
    %1357 = vdwg.mxu0
    %1358 = vmatprep.subr.mxu0 %v69
    %1359 = vmatpush1.msra.mxu0 %v68
    %1360 = vmatprep.subr.mxu0 %v73
    %1361 = vmatpush1.msra.mxu0 %v72
    %1362 = vmatprep.subr.mxu0 %v77
    %1363 = vmatpush1.msra.mxu0 %v76
    %1364 = vmatprep.subr.mxu0 %v81
    %1365 = vmatpush1.msra.mxu0 %v80
    %1366 = vmatprep.subr.mxu0 %v85
    %1367 = vmatpush1.msra.mxu0 %v84
    %1368 = vmatprep.subr.mxu0 %v89
    %1369 = vmatpush1.msra.mxu0 %v88
    %1370 = vmatprep.subr.mxu0 %v93
    %1371 = vmatpush1.msra.mxu0 %v92
    %1372 = vmatprep.subr.mxu0 %v97
    %1373 = vmatpush1.msra.mxu0 %v96
    %1374 = vmatprep.subr.mxu0 %v101
    %1375 = vmatpush1.msra.mxu0 %v100
    %1376 = vmatprep.subr.mxu0 %v105
    %1377 = vmatpush1.msra.mxu0 %v104
    %1378 = vmatprep.subr.mxu0 %v109
    %1379 = vmatpush1.msra.mxu0 %v108
    %1380 = vmatprep.subr.mxu0 %v113
    %1381 = vmatpush1.msra.mxu0 %v112
    %1382 = vmatprep.subr.mxu0 %v117
    %1383 = vmatpush1.msra.mxu0 %v116
    %1384 = vmatprep.subr.mxu0 %v121
    %1385 = vmatpush1.msra.mxu0 %v120
    %1386 = vmatprep.subr.mxu0 %v125
    %1387 = vmatpush1.msra.mxu0 %v124
    %1388 = vmatprep.subr.mxu0 %v129
    %1389 = vmatpush1.msra.mxu0 %v128
    %1390 = vmatprep.subr.mxu0 0.0
    %1391 = vmatpush1.msra.mxu0 0.0
    %1392 = vmatprep.subr.mxu0 0.0
    %1393 = vmatpush1.msra.mxu0 0.0
    %1394 = vmatprep.subr.mxu0 0.0
    %1395 = vmatpush1.msra.mxu0 0.0
    %1396 = vmatprep.subr.mxu0 0.0
    %1397 = vmatpush1.msra.mxu0 0.0
    %1398 = vmatprep.subr.mxu0 0.0
    %1399 = vmatpush1.msra.mxu0 0.0
    %1400 = vmatprep.subr.mxu0 0.0
    %1401 = vmatpush1.msra.mxu0 0.0
    %1402 = vmatprep.subr.mxu0 0.0
    %1403 = vmatpush1.msra.mxu0 0.0
    %1404 = vmatprep.subr.mxu0 0.0
    %1405 = vmatpush1.msra.mxu0 0.0
    %1406 = vmatprep.subr.mxu0 0.0
    %1407 = vmatpush1.msra.mxu0 0.0
    %1408 = vmatprep.subr.mxu0 0.0
    %1409 = vmatpush1.msra.mxu0 0.0
    %1410 = vmatprep.subr.mxu0 0.0
    %1411 = vmatpush1.msra.mxu0 0.0
    %1412 = vmatprep.subr.mxu0 0.0
    %1413 = vmatpush1.msra.mxu0 0.0
    %1414 = vmatprep.subr.mxu0 0.0
    %1415 = vmatpush1.msra.mxu0 0.0
    %1416 = vmatprep.subr.mxu0 0.0
    %1417 = vmatpush1.msra.mxu0 0.0
    %1418 = vmatprep.subr.mxu0 0.0
    %1419 = vmatpush1.msra.mxu0 0.0
    %1420 = vmatprep.subr.mxu0 0.0
    %1421 = vmatpush1.msra.mxu0 0.0
    %1422 = vmatprep.mubr.f32.mxu0 0.0
    %1423 = vmatmul.mubr.f32.gmra.mrb[0].mxu0 %v1265
    %v1424 = vpop.f32.mrb[0].mxu0
    %v1425 = vadd.f32 0.0, %v1424
    %v1426 = vpop.f32.mrb[0].mxu0
    %v1427 = vadd.f32 0.0, %v1426
    %1428 = vdwg.mxu0
    %v1429 = vadd.f32 %v1283, %v1354
    %v1430 = vadd.f32 %v1284, %v1356
    %v1431 = vadd.f32 %v1285, %v1425
    %v1432 = vadd.f32 %v1286, %v1427
    %v1433 = vxor.u32 %v1429, 2147483648
    %v1434 = vmul.f32 %v1433, 1.442695
    %v1435 = vpow.pop %v1434
    %v1436 = vadd.f32 %v1435, 1.0
    %v1437 = vrcp.pop %v1436
    %v1438 = vmul.f32 1.0, %v1437
    %v1439 = vxor.u32 %v1430, 2147483648
    %v1440 = vmul.f32 %v1439, 1.442695
    %v1441 = vpow.pop %v1440
    %v1442 = vadd.f32 %v1441, 1.0
    %v1443 = vrcp.pop %v1442
    %v1444 = vmul.f32 1.0, %v1443
    %v1445 = vtanh.pop %v1431
    %v1446 = vxor.u32 %v1432, 2147483648
    %v1447 = vmul.f32 %v1446, 1.442695
    %v1448 = vpow.pop %v1447
    %v1449 = vadd.f32 %v1448, 1.0
    %v1450 = vrcp.pop %v1449
    %v1451 = vmul.f32 1.0, %v1450
    %v1452 = vmul.f32 %v1444, %v1263
    %v1453 = vmul.f32 %v1438, %v1445
    %v1454 = vadd.f32 %v1452, %v1453
    %v1455 = vtanh.pop %v1454
    %v1456 = vmul.f32 %v1451, %v1455
    %v1457 = vmul.f32 %v1456, %v310
    %1458 = vadd.xlane.f32.xlu0 %v1457
    %v1459 = vpop.xlane.xlu0 %1458
    %v1460 = vadd.f32 %v1459, %v315
    %v1461 = vmax.f32 %v1270, %v1460
    %v1462 = vsub.f32 %v1270, %v1461
    %v1463 = vmul.f32 %v1462, 1.442695
    %v1464 = vpow.pop %v1463
    %v1465 = vsub.f32 %v1460, %v1461
    %v1466 = vmul.f32 %v1465, 1.442695
    %v1467 = vpow.pop %v1466
    %v1468 = vmul.f32 %v1464, %v1278
    %v1469 = vadd.f32 %v1468, %v1467
    %v1470 = vmul.f32 %v1464, %v1281
    %v1471 = vmul.f32 %v1467, %v1456
    %v1472 = vadd.f32 %v1470, %v1471
    %s1473 = scalar_lea.vmem [#allocation3], 224
    %v1474 = vld [vmem:[%s1473] sm:$0xff]
    %v1475 = vld [vmem:[%s1473 + $0x8] sm:$0xff]
    %v1476 = vld [vmem:[%s1473 + $0x10] sm:$0xff]
    %v1477 = vld [vmem:[%s1473 + $0x18] sm:$0xff]
    %1478 = vmatprep.subr.mxu0 %v67
    %1479 = vmatpush1.msra.mxu0 %v66
    %1480 = vmatprep.subr.mxu0 %v71
    %1481 = vmatpush1.msra.mxu0 %v70
    %1482 = vmatprep.subr.mxu0 %v75
    %1483 = vmatpush1.msra.mxu0 %v74
    %1484 = vmatprep.subr.mxu0 %v79
    %1485 = vmatpush1.msra.mxu0 %v78
    %1486 = vmatprep.subr.mxu0 %v83
    %1487 = vmatpush1.msra.mxu0 %v82
    %1488 = vmatprep.subr.mxu0 %v87
    %1489 = vmatpush1.msra.mxu0 %v86
    %1490 = vmatprep.subr.mxu0 %v91
    %1491 = vmatpush1.msra.mxu0 %v90
    %1492 = vmatprep.subr.mxu0 %v95
    %1493 = vmatpush1.msra.mxu0 %v94
    %1494 = vmatprep.subr.mxu0 %v99
    %1495 = vmatpush1.msra.mxu0 %v98
    %1496 = vmatprep.subr.mxu0 %v103
    %1497 = vmatpush1.msra.mxu0 %v102
    %1498 = vmatprep.subr.mxu0 %v107
    %1499 = vmatpush1.msra.mxu0 %v106
    %1500 = vmatprep.subr.mxu0 %v111
    %1501 = vmatpush1.msra.mxu0 %v110
    %1502 = vmatprep.subr.mxu0 %v115
    %1503 = vmatpush1.msra.mxu0 %v114
    %1504 = vmatprep.subr.mxu0 %v119
    %1505 = vmatpush1.msra.mxu0 %v118
    %1506 = vmatprep.subr.mxu0 %v123
    %1507 = vmatpush1.msra.mxu0 %v122
    %1508 = vmatprep.subr.mxu0 %v127
    %1509 = vmatpush1.msra.mxu0 %v126
    %1510 = vmatprep.subr.mxu0 0.0
    %1511 = vmatpush1.msra.mxu0 0.0
    %1512 = vmatprep.subr.mxu0 0.0
    %1513 = vmatpush1.msra.mxu0 0.0
    %1514 = vmatprep.subr.mxu0 0.0
    %1515 = vmatpush1.msra.mxu0 0.0
    %1516 = vmatprep.subr.mxu0 0.0
    %1517 = vmatpush1.msra.mxu0 0.0
    %1518 = vmatprep.subr.mxu0 0.0
    %1519 = vmatpush1.msra.mxu0 0.0
    %1520 = vmatprep.subr.mxu0 0.0
    %1521 = vmatpush1.msra.mxu0 0.0
    %1522 = vmatprep.subr.mxu0 0.0
    %1523 = vmatpush1.msra.mxu0 0.0
    %1524 = vmatprep.subr.mxu0 0.0
    %1525 = vmatpush1.msra.mxu0 0.0
    %1526 = vmatprep.subr.mxu0 0.0
    %1527 = vmatpush1.msra.mxu0 0.0
    %1528 = vmatprep.subr.mxu0 0.0
    %1529 = vmatpush1.msra.mxu0 0.0
    %1530 = vmatprep.subr.mxu0 0.0
    %1531 = vmatpush1.msra.mxu0 0.0
    %1532 = vmatprep.subr.mxu0 0.0
    %1533 = vmatpush1.msra.mxu0 0.0
    %1534 = vmatprep.subr.mxu0 0.0
    %1535 = vmatpush1.msra.mxu0 0.0
    %1536 = vmatprep.subr.mxu0 0.0
    %1537 = vmatpush1.msra.mxu0 0.0
    %1538 = vmatprep.subr.mxu0 0.0
    %1539 = vmatpush1.msra.mxu0 0.0
    %1540 = vmatprep.subr.mxu0 0.0
    %1541 = vmatpush1.msra.mxu0 0.0
    %1542 = vmatprep.mubr.f32.mxu0 0.0
    %1543 = vmatmul.mubr.f32.gmra.mrb[0].mxu0 %v1456
    %v1544 = vpop.f32.mrb[0].mxu0
    %v1545 = vadd.f32 0.0, %v1544
    %v1546 = vpop.f32.mrb[0].mxu0
    %v1547 = vadd.f32 0.0, %v1546
    %1548 = vdwg.mxu0
    %1549 = vmatprep.subr.mxu0 %v69
    %1550 = vmatpush1.msra.mxu0 %v68
    %1551 = vmatprep.subr.mxu0 %v73
    %1552 = vmatpush1.msra.mxu0 %v72
    %1553 = vmatprep.subr.mxu0 %v77
    %1554 = vmatpush1.msra.mxu0 %v76
    %1555 = vmatprep.subr.mxu0 %v81
    %1556 = vmatpush1.msra.mxu0 %v80
    %1557 = vmatprep.subr.mxu0 %v85
    %1558 = vmatpush1.msra.mxu0 %v84
    %1559 = vmatprep.subr.mxu0 %v89
    %1560 = vmatpush1.msra.mxu0 %v88
    %1561 = vmatprep.subr.mxu0 %v93
    %1562 = vmatpush1.msra.mxu0 %v92
    %1563 = vmatprep.subr.mxu0 %v97
    %1564 = vmatpush1.msra.mxu0 %v96
    %1565 = vmatprep.subr.mxu0 %v101
    %1566 = vmatpush1.msra.mxu0 %v100
    %1567 = vmatprep.subr.mxu0 %v105
    %1568 = vmatpush1.msra.mxu0 %v104
    %1569 = vmatprep.subr.mxu0 %v109
    %1570 = vmatpush1.msra.mxu0 %v108
    %1571 = vmatprep.subr.mxu0 %v113
    %1572 = vmatpush1.msra.mxu0 %v112
    %1573 = vmatprep.subr.mxu0 %v117
    %1574 = vmatpush1.msra.mxu0 %v116
    %1575 = vmatprep.subr.mxu0 %v121
    %1576 = vmatpush1.msra.mxu0 %v120
    %1577 = vmatprep.subr.mxu0 %v125
    %1578 = vmatpush1.msra.mxu0 %v124
    %1579 = vmatprep.subr.mxu0 %v129
    %1580 = vmatpush1.msra.mxu0 %v128
    %1581 = vmatprep.subr.mxu0 0.0
    %1582 = vmatpush1.msra.mxu0 0.0
    %1583 = vmatprep.subr.mxu0 0.0
    %1584 = vmatpush1.msra.mxu0 0.0
    %1585 = vmatprep.subr.mxu0 0.0
    %1586 = vmatpush1.msra.mxu0 0.0
    %1587 = vmatprep.subr.mxu0 0.0
    %1588 = vmatpush1.msra.mxu0 0.0
    %1589 = vmatprep.subr.mxu0 0.0
    %1590 = vmatpush1.msra.mxu0 0.0
    %1591 = vmatprep.subr.mxu0 0.0
    %1592 = vmatpush1.msra.mxu0 0.0
    %1593 = vmatprep.subr.mxu0 0.0
    %1594 = vmatpush1.msra.mxu0 0.0
    %1595 = vmatprep.subr.mxu0 0.0
    %1596 = vmatpush1.msra.mxu0 0.0
    %1597 = vmatprep.subr.mxu0 0.0
    %1598 = vmatpush1.msra.mxu0 0.0
    %1599 = vmatprep.subr.mxu0 0.0
    %1600 = vmatpush1.msra.mxu0 0.0
    %1601 = vmatprep.subr.mxu0 0.0
    %1602 = vmatpush1.msra.mxu0 0.0
    %1603 = vmatprep.subr.mxu0 0.0
    %1604 = vmatpush1.msra.mxu0 0.0
    %1605 = vmatprep.subr.mxu0 0.0
    %1606 = vmatpush1.msra.mxu0 0.0
    %1607 = vmatprep.subr.mxu0 0.0
    %1608 = vmatpush1.msra.mxu0 0.0
    %1609 = vmatprep.subr.mxu0 0.0
    %1610 = vmatpush1.msra.mxu0 0.0
    %1611 = vmatprep.subr.mxu0 0.0
    %1612 = vmatpush1.msra.mxu0 0.0
    %1613 = vmatprep.mubr.f32.mxu0 0.0
    %1614 = vmatmul.mubr.f32.gmra.mrb[0].mxu0 %v1456
    %v1615 = vpop.f32.mrb[0].mxu0
    %v1616 = vadd.f32 0.0, %v1615
    %v1617 = vpop.f32.mrb[0].mxu0
    %v1618 = vadd.f32 0.0, %v1617
    %1619 = vdwg.mxu0
    %v1620 = vadd.f32 %v1474, %v1545
    %v1621 = vadd.f32 %v1475, %v1547
    %v1622 = vadd.f32 %v1476, %v1616
    %v1623 = vadd.f32 %v1477, %v1618
    %v1624 = vxor.u32 %v1620, 2147483648
    %v1625 = vmul.f32 %v1624, 1.442695
    %v1626 = vpow.pop %v1625
    %v1627 = vadd.f32 %v1626, 1.0
    %v1628 = vrcp.pop %v1627
    %v1629 = vmul.f32 1.0, %v1628
    %v1630 = vxor.u32 %v1621, 2147483648
    %v1631 = vmul.f32 %v1630, 1.442695
    %v1632 = vpow.pop %v1631
    %v1633 = vadd.f32 %v1632, 1.0
    %v1634 = vrcp.pop %v1633
    %v1635 = vmul.f32 1.0, %v1634
    %v1636 = vtanh.pop %v1622
    %v1637 = vxor.u32 %v1623, 2147483648
    %v1638 = vmul.f32 %v1637, 1.442695
    %v1639 = vpow.pop %v1638
    %v1640 = vadd.f32 %v1639, 1.0
    %v1641 = vrcp.pop %v1640
    %v1642 = vmul.f32 1.0, %v1641
    %v1643 = vmul.f32 %v1635, %v1454
    %v1644 = vmul.f32 %v1629, %v1636
    %v1645 = vadd.f32 %v1643, %v1644
    %v1646 = vtanh.pop %v1645
    %v1647 = vmul.f32 %v1642, %v1646
    %v1648 = vmul.f32 %v1647, %v310
    %1649 = vadd.xlane.f32.xlu0 %v1648
    %v1650 = vpop.xlane.xlu0 %1649
    %v1651 = vadd.f32 %v1650, %v315
    %v1652 = vmax.f32 %v1461, %v1651
    %v1653 = vsub.f32 %v1461, %v1652
    %v1654 = vmul.f32 %v1653, 1.442695
    %v1655 = vpow.pop %v1654
    %v1656 = vsub.f32 %v1651, %v1652
    %v1657 = vmul.f32 %v1656, 1.442695
    %v1658 = vpow.pop %v1657
    %v1659 = vmul.f32 %v1655, %v1469
    %v1660 = vadd.f32 %v1659, %v1658
    %v1661 = vmul.f32 %v1655, %v1472
    %v1662 = vmul.f32 %v1658, %v1647
    %v1663 = vadd.f32 %v1661, %v1662
    %v1664 = vrcp.pop %v1660
    %v1665 = vmul.f32 %v1660, %v1664
    %v1666 = vsub.f32 2.0, %v1665
    %v1667 = vmul.f32 %v1664, %v1666
    %v1668 = vmul.f32 %v1663, %v1667
    %v1669 = vld [vmem:[#allocation8] sm:$0xff]
    %v1670 = vld [vmem:[#allocation8 + $0x8] sm:$0xff]
    %v1671 = vld [vmem:[#allocation8 + $0x10] sm:$0xff]
    %v1672 = vld [vmem:[#allocation8 + $0x18] sm:$0xff]
    %v1673 = vld [vmem:[#allocation8 + $0x20] sm:$0xff]
    %v1674 = vld [vmem:[#allocation8 + $0x28] sm:$0xff]
    %v1675 = vld [vmem:[#allocation8 + $0x30] sm:$0xff]
    %v1676 = vld [vmem:[#allocation8 + $0x38] sm:$0xff]
    %v1677 = vld [vmem:[#allocation8 + $0x40] sm:$0xff]
    %v1678 = vld [vmem:[#allocation8 + $0x48] sm:$0xff]
    %v1679 = vld [vmem:[#allocation8 + $0x50] sm:$0xff]
    %v1680 = vld [vmem:[#allocation8 + $0x58] sm:$0xff]
    %v1681 = vld [vmem:[#allocation8 + $0x60] sm:$0xff]
    %v1682 = vld [vmem:[#allocation8 + $0x68] sm:$0xff]
    %v1683 = vld [vmem:[#allocation8 + $0x70] sm:$0xff]
    %v1684 = vld [vmem:[#allocation8 + $0x78] sm:$0xff]
    %v1685 = vld [vmem:[%s5] sm:$0x1]
    %v1687 = vlaneseq
    %v1688 = vshrl.u32 %v1687, 7
    %v1689 = vsub.s32 0, %v1688
    %v1690 = vrot.slane %v1685, %v1689
    %1692 = vmatprep.subr.mxu0 0.0
    %1693 = vmatpush1.msra.mxu0 %v1669
    %1694 = vmatprep.subr.mxu0 0.0
    %1695 = vmatpush1.msra.mxu0 %v1670
    %1696 = vmatprep.subr.mxu0 0.0
    %1697 = vmatpush1.msra.mxu0 %v1671
    %1698 = vmatprep.subr.mxu0 0.0
    %1699 = vmatpush1.msra.mxu0 %v1672
    %1700 = vmatprep.subr.mxu0 0.0
    %1701 = vmatpush1.msra.mxu0 %v1673
    %1702 = vmatprep.subr.mxu0 0.0
    %1703 = vmatpush1.msra.mxu0 %v1674
    %1704 = vmatprep.subr.mxu0 0.0
    %1705 = vmatpush1.msra.mxu0 %v1675
    %1706 = vmatprep.subr.mxu0 0.0
    %1707 = vmatpush1.msra.mxu0 %v1676
    %1708 = vmatprep.subr.mxu0 0.0
    %1709 = vmatpush1.msra.mxu0 %v1677
    %1710 = vmatprep.subr.mxu0 0.0
    %1711 = vmatpush1.msra.mxu0 %v1678
    %1712 = vmatprep.subr.mxu0 0.0
    %1713 = vmatpush1.msra.mxu0 %v1679
    %1714 = vmatprep.subr.mxu0 0.0
    %1715 = vmatpush1.msra.mxu0 %v1680
    %1716 = vmatprep.subr.mxu0 0.0
    %1717 = vmatpush1.msra.mxu0 %v1681
    %1718 = vmatprep.subr.mxu0 0.0
    %1719 = vmatpush1.msra.mxu0 %v1682
    %1720 = vmatprep.subr.mxu0 0.0
    %1721 = vmatpush1.msra.mxu0 %v1683
    %1722 = vmatprep.subr.mxu0 0.0
    %1723 = vmatpush1.msra.mxu0 %v1684
    %1724 = vmatprep.subr.mxu0 0.0
    %1725 = vmatpush1.msra.mxu0 0.0
    %1726 = vmatprep.subr.mxu0 0.0
    %1727 = vmatpush1.msra.mxu0 0.0
    %1728 = vmatprep.subr.mxu0 0.0
    %1729 = vmatpush1.msra.mxu0 0.0
    %1730 = vmatprep.subr.mxu0 0.0
    %1731 = vmatpush1.msra.mxu0 0.0
    %1732 = vmatprep.subr.mxu0 0.0
    %1733 = vmatpush1.msra.mxu0 0.0
    %1734 = vmatprep.subr.mxu0 0.0
    %1735 = vmatpush1.msra.mxu0 0.0
    %1736 = vmatprep.subr.mxu0 0.0
    %1737 = vmatpush1.msra.mxu0 0.0
    %1738 = vmatprep.subr.mxu0 0.0
    %1739 = vmatpush1.msra.mxu0 0.0
    %1740 = vmatprep.subr.mxu0 0.0
    %1741 = vmatpush1.msra.mxu0 0.0
    %1742 = vmatprep.subr.mxu0 0.0
    %1743 = vmatpush1.msra.mxu0 0.0
    %1744 = vmatprep.subr.mxu0 0.0
    %1745 = vmatpush1.msra.mxu0 0.0
    %1746 = vmatprep.subr.mxu0 0.0
    %1747 = vmatpush1.msra.mxu0 0.0
    %1748 = vmatprep.subr.mxu0 0.0
    %1749 = vmatpush1.msra.mxu0 0.0
    %1750 = vmatprep.subr.mxu0 0.0
    %1751 = vmatpush1.msra.mxu0 0.0
    %1752 = vmatprep.subr.mxu0 0.0
    %1753 = vmatpush1.msra.mxu0 0.0
    %1754 = vmatprep.subr.mxu0 0.0
    %1755 = vmatpush1.msra.mxu0 0.0
    %1756 = vmatprep.mubr.f32.mxu0 0.0
    %1757 = vmatmul.mubr.f32.gmra.mrb[0].mxu0 %v1668
    %v1758 = vpop.f32.mrb[0].mxu0
    %v1759 = vadd.f32 %v1690, %v1758
    %v1760 = vpop.f32.mrb[0].mxu0
    %1761 = vdwg.mxu0
    %1762 = vst [vmem:[#allocation9] sm:$0xff] %v1759
    // Predicated region
    $region38: #{tpu_custom_call.1} parent=1 // pred_check
      _
    $region39: #{tpu_custom_call.1} parent=1 // pred_check_branch
      %1764 = sbr.rel (0) target = $region41
    $region40: #{tpu_custom_call.1} parent=1 // pred_region
      %s1766 = ssub.s32 128, 128
      %1767 = vsyncadd [#allocation5], %s1766
      %s1769 = sshll.u32 [#allocation9], 4
      %s1770 = int_to_ptr.vmem [resolvable:$true] %s1769
      %1772 = dma.vmem_to_hbm [thread:$0]  %s1770, 128, %s6, [#allocation5]
    $region41: #{tpu_custom_call.1} parent=1 // pred_fallthru
      _
    // Predicated region
    $region42: #{tpu_custom_call.1} parent=1 // pred_check
      _
    $region43: #{tpu_custom_call.1} parent=1 // pred_check_branch
      %1774 = sbr.rel (0) target = $region45
    $region44: #{tpu_custom_call.1} parent=1 // pred_region
      %1775 = dma.done [#allocation5], 128
    $region45: #{tpu_custom_call.1} parent=1 // pred_fallthru
      _
    %1776 = vsyncpa [#allocation4], 1
    %1777 = vsyncpa [#allocation7], 1
    %1778 = vsyncpa [#allocation5], 1

</llo_original>
